<compile_context>
chip_gen: v6e
topology: v6e:2x2x1
jax: 0.10.0
libtpu: 0.0.40
codegen_flags: <defaults>
</compile_context>

<pallas_src>
import jax
import jax.numpy as jnp
from jax.experimental import pallas as pl
from jax.experimental.pallas import tpu as pltpu


def _mm(a, b):
    """MXU matmul: bf16 operands, f32 accumulation."""
    return jnp.dot(a.astype(jnp.bfloat16), b.astype(jnp.bfloat16),
                   preferred_element_type=jnp.float32)


# ---------------------------------------------------------------------------
# Kernel: one GRU-GNN timestep per grid iteration (grid=(T,), sequential).
# ---------------------------------------------------------------------------
def gru_gnn_step_kernel(A_ref, x_ref,
                        ruW1h_ref, ruW1x_ref, ruW2_ref, ruW3_ref,
                        rhW1h_ref, rhW1x_ref, rhW2_ref, rhW3_ref,
                        ru_b1_ref, ru_b2_ref, ru_b3_ref,
                        rh_b1_ref, rh_b2_ref, rh_b3_ref,
                        hs_ref, h_state):
    t = pl.program_id(0)
    E = rhW3_ref.shape[1]

    @pl.when(t == 0)
    def _():
        h_state[...] = jnp.zeros_like(h_state)   # matches PyTorch h0 = zeros

    A = A_ref[...]                  # (N, N) bf16
    x = x_ref[0]                    # (N, F) bf16  (streamed tile for step t)
    h = h_state[...]                # (N, E) f32   (recurrent state)

    # x-dependent halves of both layer-1 projections (independent of h,
    # so off the serial h-dependency chain).
    xp_ru = _mm(x, ruW1x_ref[...])  # (N, H)
    xp_rh = _mm(x, rhW1x_ref[...])  # (N, H)

    # ---- GNN_ru applied to cat(h, x): split-weight form, no lane concat ----
    h1 = jnp.maximum(_mm(A, _mm(h, ruW1h_ref[...]) + xp_ru) + ru_b1_ref[...], 0.0)
    h2 = jnp.maximum(_mm(A, _mm(h1, ruW2_ref[...])) + ru_b2_ref[...], 0.0)
    ru = jax.nn.sigmoid(_mm(A, _mm(h2, ruW3_ref[...])) + ru_b3_ref[...])   # (N, 2E)
    r = ru[:, :E]
    z = ru[:, E:]

    # ---- GNN_reset_h applied to cat(h*r, x) ----
    hm = h * r
    g1 = jnp.maximum(_mm(A, _mm(hm, rhW1h_ref[...]) + xp_rh) + rh_b1_ref[...], 0.0)
    g2 = jnp.maximum(_mm(A, _mm(g1, rhW2_ref[...])) + rh_b2_ref[...], 0.0)
    h_cand = jnp.tanh(_mm(A, _mm(g2, rhW3_ref[...])) + rh_b3_ref[...])     # (N, E)

    # GRU update (all f32 elementwise).
    h_new = z * h + (1.0 - z) * h_cand
    h_state[...] = h_new
    # TODO(synk): for production configs with E < 128 a lane-dense (T, N*E)
    # output layout would turn these masked stores / narrow DMAs into full ones.
    hs_ref[0] = h_new.astype(hs_ref.dtype)


# ---------------------------------------------------------------------------
# Wrapper
# ---------------------------------------------------------------------------
def rnn_with_graph_convolution_pallas(A_hat, Xs, params):
    """A_hat: (N,N) normalized adjacency.  Xs: (T,N,F).  params: dict of weights."""
    T, N, F = Xs.shape
    E = params["rh_W3"].shape[1]            # node_embsize
    H = params["ru_W2"].shape[0]            # GNN_hid_dim

    cdt = jnp.bfloat16
    # MXU operands in bf16 (halves residency + MXU passes); accumulation is f32.
    A_bf = A_hat.astype(cdt)
    Xs_bf = Xs.astype(cdt)
    # Split layer-1 weights into h-rows ([:E]) and x-rows ([E:]).
    ru_W1_h = params["ru_W1"][:E].astype(cdt)
    ru_W1_x = params["ru_W1"][E:].astype(cdt)
    rh_W1_h = params["rh_W1"][:E].astype(cdt)
    rh_W1_x = params["rh_W1"][E:].astype(cdt)
    ru_W2 = params["ru_W2"].astype(cdt)
    ru_W3 = params["ru_W3"].astype(cdt)
    rh_W2 = params["rh_W2"].astype(cdt)
    rh_W3 = params["rh_W3"].astype(cdt)
    ru_b1 = params["ru_b1"].astype(jnp.float32)
    ru_b2 = params["ru_b2"].astype(jnp.float32)
    ru_b3 = params["ru_b3"].astype(jnp.float32)
    rh_b1 = params["rh_b1"].astype(jnp.float32)
    rh_b2 = params["rh_b2"].astype(jnp.float32)
    rh_b3 = params["rh_b3"].astype(jnp.float32)

    def const2d(shape):
        return pl.BlockSpec(shape, lambda t: (0, 0))   # resident across all steps

    in_specs = [
        const2d((N, N)),                                  # A_hat (bf16)
        pl.BlockSpec((1, N, F), lambda t: (t, 0, 0)),     # Xs, streamed per step
        const2d((E, H)), const2d((F, H)),                 # ru_W1_h, ru_W1_x
        const2d((H, H)), const2d((H, 2 * E)),             # ru_W2,  ru_W3
        const2d((E, H)), const2d((F, H)),                 # rh_W1_h, rh_W1_x
        const2d((H, H)), const2d((H, E)),                 # rh_W2,  rh_W3
        const2d((1, H)), const2d((1, H)), const2d((1, 2 * E)),   # ru biases
        const2d((1, H)), const2d((1, H)), const2d((1, E)),       # rh biases
    ]
    out_specs = pl.BlockSpec((1, N, E), lambda t: (t, 0, 0))      # hs, streamed

    # Explicit VMEM budget: resident A + weights + biases, double-buffered
    # x / hs tiles, persistent h scratch, plus generous headroom.
    resident = 2 * (N * N + 2 * F * H + 2 * E * H + 2 * H * H + 3 * H * E)  # bf16
    resident += 4 * (4 * H + 3 * E)                                         # f32 biases
    streamed = 2 * (2 * N * F) + 2 * (4 * N * E)                            # dbl-buffered tiles
    scratch = 4 * N * E
    vmem_limit = int(min(max(4 * (resident + streamed + scratch), 8 << 20), 48 << 20))

    grid_spec = pltpu.PrefetchScalarGridSpec(
        num_scalar_prefetch=0,
        grid=(T,),                                        # sequential recurrence
        in_specs=in_specs,
        out_specs=out_specs,
        scratch_shapes=[pltpu.VMEM((N, E), jnp.float32)],  # persistent h state
    )

    # TODO(synk): for N >~ 2K on v7x the fully-resident (N,N) A_hat block should
    # be tiled over a node-row grid axis (rows parallel, columns as a reduction).
    return pl.pallas_call(
        gru_gnn_step_kernel,
        out_shape=jax.ShapeDtypeStruct((T, N, E), jnp.float32),
        grid_spec=grid_spec,
        compiler_params=pltpu.CompilerParams(
            dimension_semantics=("arbitrary",),           # h carried across steps
            vmem_limit_bytes=vmem_limit),
    )(A_bf, Xs_bf,
      ru_W1_h, ru_W1_x, ru_W2, ru_W3,
      rh_W1_h, rh_W1_x, rh_W2, rh_W3,
      ru_b1, ru_b2, ru_b3, rh_b1, rh_b2, rh_b3)


# ---------------------------------------------------------------------------
# Pure-JAX f32 reference replicating the PyTorch forward (unsplit weights).
# ---------------------------------------------------------------------------
def reference_jax(A_hat, Xs, params):
    T, N, F = Xs.shape
    E = params["rh_W3"].shape[1]

    def gnn(X, p, pref):
        h1 = jnp.maximum(A_hat @ (X @ p[pref + "_W1"]) + p[pref + "_b1"], 0.0)
        h2 = jnp.maximum(A_hat @ (h1 @ p[pref + "_W2"]) + p[pref + "_b2"], 0.0)
        return A_hat @ (h2 @ p[pref + "_W3"]) + p[pref + "_b3"]

    h = jnp.zeros((N, E), jnp.float32)
    hs = []
    for t in range(T):
        x = Xs[t]
        ru = jax.nn.sigmoid(gnn(jnp.concatenate([h, x], -1), params, "ru"))
        r, z = ru[:, :E], ru[:, E:]
        h_cand = jnp.tanh(gnn(jnp.concatenate([h * r, x], -1), params, "rh"))
        h = z * h + (1.0 - z) * h_cand
        hs.append(h)
    return jnp.stack(hs)


if __name__ == "__main__":
    # Small, deterministic problem consistent with the module:
    #   node_embsize E = 32, feature dim F = 32 -> GNN_in_dim = 64, GNN_hid_dim = 32
    #   num_nodes N = 16, sequence length T = 4
    N, E, F, H, T = 16, 32, 32, 32, 4
    D_in = E + F
    key = jax.random.PRNGKey(0)
    keys = jax.random.split(key, 16)

    # Deterministic random graph with self-loops, symmetric normalization.
    adj_logits = jax.random.uniform(keys[0], (N, N))
    A = (adj_logits > 0.7).astype(jnp.float32)
    A = jnp.maximum(A, A.T) + jnp.eye(N, dtype=jnp.float32)
    deg = jnp.sum(A, axis=1)
    d_inv_sqrt = 1.0 / jnp.sqrt(deg)
    A_hat = (A * d_inv_sqrt[:, None]) * d_inv_sqrt[None, :]

    Xs = jax.random.normal(keys[1], (T, N, F), dtype=jnp.float32)

    def init_w(k, shape, scale=0.1):
        return scale * jax.random.normal(k, shape, dtype=jnp.float32)

    # GNN_ru: in -> hid -> hid -> 2E ; GNN_reset_h: in -> hid -> hid -> E
    params = {
        "ru_W1": init_w(keys[2], (D_in, H)), "ru_b1": jnp.zeros((1, H), jnp.float32),
        "ru_W2": init_w(keys[3], (H, H)),    "ru_b2": jnp.zeros((1, H), jnp.float32),
        "ru_W3": init_w(keys[4], (H, 2 * E)), "ru_b3": jnp.zeros((1, 2 * E), jnp.float32),
        "rh_W1": init_w(keys[5], (D_in, H)), "rh_b1": jnp.zeros((1, H), jnp.float32),
        "rh_W2": init_w(keys[6], (H, H)),    "rh_b2": jnp.zeros((1, H), jnp.float32),
        "rh_W3": init_w(keys[7], (H, E)),    "rh_b3": jnp.zeros((1, E), jnp.float32),
    }

    out = rnn_with_graph_convolution_pallas(A_hat, Xs, params)
    out = jax.block_until_ready(out)

    ref = reference_jax(A_hat, Xs, params)
    assert out.shape == (T, N, E)
    # bf16 MXU operands (f32 accumulation) vs f32 reference -> loosened tolerance.
    err = jnp.max(jnp.abs(out - ref))
    assert jnp.allclose(out, ref, atol=3e-2, rtol=3e-2), f"mismatch: max abs err {err}"

    print("KERNEL_OK")
</pallas_src>

<mosaic_0001>
module attributes {stable_mosaic.version = 11 : i64} {
  func.func @gru_gnn_step_kernel(%arg0: i32, %arg1: memref<16x16xbf16, #tpu.memory_space<vmem>>, %arg2: memref<1x16x32xbf16, #tpu.memory_space<vmem>>, %arg3: memref<32x32xbf16, #tpu.memory_space<vmem>>, %arg4: memref<32x32xbf16, #tpu.memory_space<vmem>>, %arg5: memref<32x32xbf16, #tpu.memory_space<vmem>>, %arg6: memref<32x64xbf16, #tpu.memory_space<vmem>>, %arg7: memref<32x32xbf16, #tpu.memory_space<vmem>>, %arg8: memref<32x32xbf16, #tpu.memory_space<vmem>>, %arg9: memref<32x32xbf16, #tpu.memory_space<vmem>>, %arg10: memref<32x32xbf16, #tpu.memory_space<vmem>>, %arg11: memref<1x32xf32, #tpu.memory_space<vmem>>, %arg12: memref<1x32xf32, #tpu.memory_space<vmem>>, %arg13: memref<1x64xf32, #tpu.memory_space<vmem>>, %arg14: memref<1x32xf32, #tpu.memory_space<vmem>>, %arg15: memref<1x32xf32, #tpu.memory_space<vmem>>, %arg16: memref<1x32xf32, #tpu.memory_space<vmem>>, %arg17: memref<1x16x32xf32, #tpu.memory_space<vmem>>, %arg18: memref<16x32xf32, #tpu.memory_space<vmem>>) attributes {dimension_semantics = [#tpu.dimension_semantics<arbitrary>], iteration_bounds = array<i64: 4>, scalar_prefetch = 0 : i64, scratch_operands = 1 : i64, tpu.core_type = #tpu.core_type<tc>, window_params = [{pipeline_mode = #tpu.pipeline_mode<synchronous>, transform_indices = @transform_0, window_bounds = array<i64: 16, 16>}, {transform_indices = @transform_1, window_bounds = array<i64: 1, 16, 32>}, {pipeline_mode = #tpu.pipeline_mode<synchronous>, transform_indices = @transform_2, window_bounds = array<i64: 32, 32>}, {pipeline_mode = #tpu.pipeline_mode<synchronous>, transform_indices = @transform_3, window_bounds = array<i64: 32, 32>}, {pipeline_mode = #tpu.pipeline_mode<synchronous>, transform_indices = @transform_4, window_bounds = array<i64: 32, 32>}, {pipeline_mode = #tpu.pipeline_mode<synchronous>, transform_indices = @transform_5, window_bounds = array<i64: 32, 64>}, {pipeline_mode = #tpu.pipeline_mode<synchronous>, transform_indices = @transform_6, window_bounds = array<i64: 32, 32>}, {pipeline_mode = #tpu.pipeline_mode<synchronous>, transform_indices = @transform_7, window_bounds = array<i64: 32, 32>}, {pipeline_mode = #tpu.pipeline_mode<synchronous>, transform_indices = @transform_8, window_bounds = array<i64: 32, 32>}, {pipeline_mode = #tpu.pipeline_mode<synchronous>, transform_indices = @transform_9, window_bounds = array<i64: 32, 32>}, {pipeline_mode = #tpu.pipeline_mode<synchronous>, transform_indices = @transform_10, window_bounds = array<i64: 1, 32>}, {pipeline_mode = #tpu.pipeline_mode<synchronous>, transform_indices = @transform_11, window_bounds = array<i64: 1, 32>}, {pipeline_mode = #tpu.pipeline_mode<synchronous>, transform_indices = @transform_12, window_bounds = array<i64: 1, 64>}, {pipeline_mode = #tpu.pipeline_mode<synchronous>, transform_indices = @transform_13, window_bounds = array<i64: 1, 32>}, {pipeline_mode = #tpu.pipeline_mode<synchronous>, transform_indices = @transform_14, window_bounds = array<i64: 1, 32>}, {pipeline_mode = #tpu.pipeline_mode<synchronous>, transform_indices = @transform_15, window_bounds = array<i64: 1, 32>}, {transform_indices = @transform_16, window_bounds = array<i64: 1, 16, 32>}]} {
    %c0_i32 = arith.constant 0 : i32
    %0 = arith.cmpi eq, %arg0, %c0_i32 : i32
    %1 = arith.extui %0 : i1 to i32
    %c0_i32_0 = arith.constant 0 : i32
    %2 = arith.cmpi ne, %1, %c0_i32_0 : i32
    scf.if %2 {
      %cst_59 = arith.constant 0.000000e+00 : f32
      %87 = vector.broadcast %cst_59 : f32 to vector<16x32xf32>
      %c0_60 = arith.constant 0 : index
      %c0_61 = arith.constant 0 : index
      %88 = vector.load %arg18[%c0_60, %c0_61] : memref<16x32xf32, #tpu.memory_space<vmem>>, vector<16x32xf32>
      tpu.vector_store %arg18[%c0_60, %c0_61], %87 {strides = array<i32>} : memref<16x32xf32, #tpu.memory_space<vmem>>, vector<16x32xf32>,
    } else {
    }
    %c0 = arith.constant 0 : index
    %c0_1 = arith.constant 0 : index
    %3 = vector.load %arg1[%c0, %c0_1] : memref<16x16xbf16, #tpu.memory_space<vmem>>, vector<16x16xbf16>
    %c0_2 = arith.constant 0 : index
    %c0_3 = arith.constant 0 : index
    %c0_4 = arith.constant 0 : index
    %4 = vector.load %arg2[%c0_2, %c0_3, %c0_4] : memref<1x16x32xbf16, #tpu.memory_space<vmem>>, vector<1x16x32xbf16>
    %5 = vector.shape_cast %4 : vector<1x16x32xbf16> to vector<16x32xbf16>
    %c0_5 = arith.constant 0 : index
    %c0_6 = arith.constant 0 : index
    %6 = vector.load %arg18[%c0_5, %c0_6] : memref<16x32xf32, #tpu.memory_space<vmem>>, vector<16x32xf32>
    %c0_7 = arith.constant 0 : index
    %c0_8 = arith.constant 0 : index
    %7 = vector.load %arg4[%c0_7, %c0_8] : memref<32x32xbf16, #tpu.memory_space<vmem>>, vector<32x32xbf16>
    %cst = arith.constant dense<0.000000e+00> : vector<16x32xf32>
    %8 = tpu.matmul %5, %7, %cst {dimension_numbers = #tpu.dot_dimension_numbers<[1], [0], [0], [1], [0, 0, 1, 1], [], []>} : vector<16x32xbf16>, vector<32x32xbf16>, vector<16x32xf32> -> vector<16x32xf32>
    %c0_9 = arith.constant 0 : index
    %c0_10 = arith.constant 0 : index
    %9 = vector.load %arg8[%c0_9, %c0_10] : memref<32x32xbf16, #tpu.memory_space<vmem>>, vector<32x32xbf16>
    %cst_11 = arith.constant dense<0.000000e+00> : vector<16x32xf32>
    %10 = tpu.matmul %5, %9, %cst_11 {dimension_numbers = #tpu.dot_dimension_numbers<[1], [0], [0], [1], [0, 0, 1, 1], [], []>} : vector<16x32xbf16>, vector<32x32xbf16>, vector<16x32xf32> -> vector<16x32xf32>
    %c0_12 = arith.constant 0 : index
    %c0_13 = arith.constant 0 : index
    %11 = vector.load %arg3[%c0_12, %c0_13] : memref<32x32xbf16, #tpu.memory_space<vmem>>, vector<32x32xbf16>
    %12 = arith.truncf %6 : vector<16x32xf32> to vector<16x32xbf16>
    %cst_14 = arith.constant dense<0.000000e+00> : vector<16x32xf32>
    %13 = tpu.matmul %12, %11, %cst_14 {dimension_numbers = #tpu.dot_dimension_numbers<[1], [0], [0], [1], [0, 0, 1, 1], [], []>} : vector<16x32xbf16>, vector<32x32xbf16>, vector<16x32xf32> -> vector<16x32xf32>
    %14 = arith.addf %13, %8 : vector<16x32xf32>
    %15 = arith.truncf %14 : vector<16x32xf32> to vector<16x32xbf16>
    %cst_15 = arith.constant dense<0.000000e+00> : vector<16x32xf32>
    %16 = tpu.matmul %3, %15, %cst_15 {dimension_numbers = #tpu.dot_dimension_numbers<[1], [0], [0], [1], [0, 0, 1, 1], [], []>} : vector<16x16xbf16>, vector<16x32xbf16>, vector<16x32xf32> -> vector<16x32xf32>
    %c0_16 = arith.constant 0 : index
    %c0_17 = arith.constant 0 : index
    %17 = vector.load %arg11[%c0_16, %c0_17] : memref<1x32xf32, #tpu.memory_space<vmem>>, vector<1x32xf32>
    %18 = vector.broadcast %17 : vector<1x32xf32> to vector<16x32xf32>
    %19 = arith.addf %16, %18 : vector<16x32xf32>
    %cst_18 = arith.constant 0.000000e+00 : f32
    %20 = vector.broadcast %cst_18 : f32 to vector<16x32xf32>
    %21 = arith.maximumf %19, %20 : vector<16x32xf32>
    %c0_19 = arith.constant 0 : index
    %c0_20 = arith.constant 0 : index
    %22 = vector.load %arg5[%c0_19, %c0_20] : memref<32x32xbf16, #tpu.memory_space<vmem>>, vector<32x32xbf16>
    %23 = arith.truncf %21 : vector<16x32xf32> to vector<16x32xbf16>
    %cst_21 = arith.constant dense<0.000000e+00> : vector<16x32xf32>
    %24 = tpu.matmul %23, %22, %cst_21 {dimension_numbers = #tpu.dot_dimension_numbers<[1], [0], [0], [1], [0, 0, 1, 1], [], []>} : vector<16x32xbf16>, vector<32x32xbf16>, vector<16x32xf32> -> vector<16x32xf32>
    %25 = arith.truncf %24 : vector<16x32xf32> to vector<16x32xbf16>
    %cst_22 = arith.constant dense<0.000000e+00> : vector<16x32xf32>
    %26 = tpu.matmul %3, %25, %cst_22 {dimension_numbers = #tpu.dot_dimension_numbers<[1], [0], [0], [1], [0, 0, 1, 1], [], []>} : vector<16x16xbf16>, vector<16x32xbf16>, vector<16x32xf32> -> vector<16x32xf32>
    %c0_23 = arith.constant 0 : index
    %c0_24 = arith.constant 0 : index
    %27 = vector.load %arg12[%c0_23, %c0_24] : memref<1x32xf32, #tpu.memory_space<vmem>>, vector<1x32xf32>
    %28 = vector.broadcast %27 : vector<1x32xf32> to vector<16x32xf32>
    %29 = arith.addf %26, %28 : vector<16x32xf32>
    %cst_25 = arith.constant 0.000000e+00 : f32
    %30 = vector.broadcast %cst_25 : f32 to vector<16x32xf32>
    %31 = arith.maximumf %29, %30 : vector<16x32xf32>
    %c0_26 = arith.constant 0 : index
    %c0_27 = arith.constant 0 : index
    %32 = vector.load %arg6[%c0_26, %c0_27] : memref<32x64xbf16, #tpu.memory_space<vmem>>, vector<32x64xbf16>
    %33 = arith.truncf %31 : vector<16x32xf32> to vector<16x32xbf16>
    %cst_28 = arith.constant dense<0.000000e+00> : vector<16x64xf32>
    %34 = tpu.matmul %33, %32, %cst_28 {dimension_numbers = #tpu.dot_dimension_numbers<[1], [0], [0], [1], [0, 0, 1, 1], [], []>} : vector<16x32xbf16>, vector<32x64xbf16>, vector<16x64xf32> -> vector<16x64xf32>
    %35 = arith.truncf %34 : vector<16x64xf32> to vector<16x64xbf16>
    %cst_29 = arith.constant dense<0.000000e+00> : vector<16x64xf32>
    %36 = tpu.matmul %3, %35, %cst_29 {dimension_numbers = #tpu.dot_dimension_numbers<[1], [0], [0], [1], [0, 0, 1, 1], [], []>} : vector<16x16xbf16>, vector<16x64xbf16>, vector<16x64xf32> -> vector<16x64xf32>
    %c0_30 = arith.constant 0 : index
    %c0_31 = arith.constant 0 : index
    %37 = vector.load %arg13[%c0_30, %c0_31] : memref<1x64xf32, #tpu.memory_space<vmem>>, vector<1x64xf32>
    %38 = vector.broadcast %37 : vector<1x64xf32> to vector<16x64xf32>
    %39 = arith.addf %36, %38 : vector<16x64xf32>
    %40 = arith.negf %39 : vector<16x64xf32>
    %41 = math.exp %40 : vector<16x64xf32>
    %cst_32 = arith.constant 1.000000e+00 : f32
    %42 = vector.broadcast %cst_32 : f32 to vector<16x64xf32>
    %43 = arith.addf %42, %41 : vector<16x64xf32>
    %44 = arith.divf %42, %43 : vector<16x64xf32>
    %45 = vector.extract_strided_slice %44 {offsets = [0, 0], sizes = [16, 32], strides = [1, 1]} : vector<16x64xf32> to vector<16x32xf32>
    %46 = vector.extract_strided_slice %44 {offsets = [0, 32], sizes = [16, 32], strides = [1, 1]} : vector<16x64xf32> to vector<16x32xf32>
    %47 = arith.mulf %6, %45 : vector<16x32xf32>
    %c0_33 = arith.constant 0 : index
    %c0_34 = arith.constant 0 : index
    %48 = vector.load %arg7[%c0_33, %c0_34] : memref<32x32xbf16, #tpu.memory_space<vmem>>, vector<32x32xbf16>
    %49 = arith.truncf %47 : vector<16x32xf32> to vector<16x32xbf16>
    %cst_35 = arith.constant dense<0.000000e+00> : vector<16x32xf32>
    %50 = tpu.matmul %49, %48, %cst_35 {dimension_numbers = #tpu.dot_dimension_numbers<[1], [0], [0], [1], [0, 0, 1, 1], [], []>} : vector<16x32xbf16>, vector<32x32xbf16>, vector<16x32xf32> -> vector<16x32xf32>
    %51 = arith.addf %50, %10 : vector<16x32xf32>
    %52 = arith.truncf %51 : vector<16x32xf32> to vector<16x32xbf16>
    %cst_36 = arith.constant dense<0.000000e+00> : vector<16x32xf32>
    %53 = tpu.matmul %3, %52, %cst_36 {dimension_numbers = #tpu.dot_dimension_numbers<[1], [0], [0], [1], [0, 0, 1, 1], [], []>} : vector<16x16xbf16>, vector<16x32xbf16>, vector<16x32xf32> -> vector<16x32xf32>
    %c0_37 = arith.constant 0 : index
    %c0_38 = arith.constant 0 : index
    %54 = vector.load %arg14[%c0_37, %c0_38] : memref<1x32xf32, #tpu.memory_space<vmem>>, vector<1x32xf32>
    %55 = vector.broadcast %54 : vector<1x32xf32> to vector<16x32xf32>
    %56 = arith.addf %53, %55 : vector<16x32xf32>
    %cst_39 = arith.constant 0.000000e+00 : f32
    %57 = vector.broadcast %cst_39 : f32 to vector<16x32xf32>
    %58 = arith.maximumf %56, %57 : vector<16x32xf32>
    %c0_40 = arith.constant 0 : index
    %c0_41 = arith.constant 0 : index
    %59 = vector.load %arg9[%c0_40, %c0_41] : memref<32x32xbf16, #tpu.memory_space<vmem>>, vector<32x32xbf16>
    %60 = arith.truncf %58 : vector<16x32xf32> to vector<16x32xbf16>
    %cst_42 = arith.constant dense<0.000000e+00> : vector<16x32xf32>
    %61 = tpu.matmul %60, %59, %cst_42 {dimension_numbers = #tpu.dot_dimension_numbers<[1], [0], [0], [1], [0, 0, 1, 1], [], []>} : vector<16x32xbf16>, vector<32x32xbf16>, vector<16x32xf32> -> vector<16x32xf32>
    %62 = arith.truncf %61 : vector<16x32xf32> to vector<16x32xbf16>
    %cst_43 = arith.constant dense<0.000000e+00> : vector<16x32xf32>
    %63 = tpu.matmul %3, %62, %cst_43 {dimension_numbers = #tpu.dot_dimension_numbers<[1], [0], [0], [1], [0, 0, 1, 1], [], []>} : vector<16x16xbf16>, vector<16x32xbf16>, vector<16x32xf32> -> vector<16x32xf32>
    %c0_44 = arith.constant 0 : index
    %c0_45 = arith.constant 0 : index
    %64 = vector.load %arg15[%c0_44, %c0_45] : memref<1x32xf32, #tpu.memory_space<vmem>>, vector<1x32xf32>
    %65 = vector.broadcast %64 : vector<1x32xf32> to vector<16x32xf32>
    %66 = arith.addf %63, %65 : vector<16x32xf32>
    %cst_46 = arith.constant 0.000000e+00 : f32
    %67 = vector.broadcast %cst_46 : f32 to vector<16x32xf32>
    %68 = arith.maximumf %66, %67 : vector<16x32xf32>
    %c0_47 = arith.constant 0 : index
    %c0_48 = arith.constant 0 : index
    %69 = vector.load %arg10[%c0_47, %c0_48] : memref<32x32xbf16, #tpu.memory_space<vmem>>, vector<32x32xbf16>
    %70 = arith.truncf %68 : vector<16x32xf32> to vector<16x32xbf16>
    %cst_49 = arith.constant dense<0.000000e+00> : vector<16x32xf32>
    %71 = tpu.matmul %70, %69, %cst_49 {dimension_numbers = #tpu.dot_dimension_numbers<[1], [0], [0], [1], [0, 0, 1, 1], [], []>} : vector<16x32xbf16>, vector<32x32xbf16>, vector<16x32xf32> -> vector<16x32xf32>
    %72 = arith.truncf %71 : vector<16x32xf32> to vector<16x32xbf16>
    %cst_50 = arith.constant dense<0.000000e+00> : vector<16x32xf32>
    %73 = tpu.matmul %3, %72, %cst_50 {dimension_numbers = #tpu.dot_dimension_numbers<[1], [0], [0], [1], [0, 0, 1, 1], [], []>} : vector<16x16xbf16>, vector<16x32xbf16>, vector<16x32xf32> -> vector<16x32xf32>
    %c0_51 = arith.constant 0 : index
    %c0_52 = arith.constant 0 : index
    %74 = vector.load %arg16[%c0_51, %c0_52] : memref<1x32xf32, #tpu.memory_space<vmem>>, vector<1x32xf32>
    %75 = vector.broadcast %74 : vector<1x32xf32> to vector<16x32xf32>
    %76 = arith.addf %73, %75 : vector<16x32xf32>
    %77 = math.tanh %76 : vector<16x32xf32>
    %78 = arith.mulf %46, %6 : vector<16x32xf32>
    %cst_53 = arith.constant 1.000000e+00 : f32
    %79 = vector.broadcast %cst_53 : f32 to vector<16x32xf32>
    %80 = arith.subf %79, %46 : vector<16x32xf32>
    %81 = arith.mulf %80, %77 : vector<16x32xf32>
    %82 = arith.addf %78, %81 : vector<16x32xf32>
    %c0_54 = arith.constant 0 : index
    %c0_55 = arith.constant 0 : index
    %83 = vector.load %arg18[%c0_54, %c0_55] : memref<16x32xf32, #tpu.memory_space<vmem>>, vector<16x32xf32>
    tpu.vector_store %arg18[%c0_54, %c0_55], %82 {strides = array<i32>} : memref<16x32xf32, #tpu.memory_space<vmem>>, vector<16x32xf32>,
    %c0_56 = arith.constant 0 : index
    %c0_57 = arith.constant 0 : index
    %c0_58 = arith.constant 0 : index
    %84 = vector.load %arg17[%c0_56, %c0_57, %c0_58] : memref<1x16x32xf32, #tpu.memory_space<vmem>>, vector<1x16x32xf32>
    %85 = vector.shape_cast %84 : vector<1x16x32xf32> to vector<16x32xf32>
    %86 = vector.shape_cast %82 : vector<16x32xf32> to vector<1x16x32xf32>
    tpu.vector_store %arg17[%c0_56, %c0_57, %c0_58], %86 {strides = array<i32>} : memref<1x16x32xf32, #tpu.memory_space<vmem>>, vector<1x16x32xf32>,
    return
  }
  func.func @transform_0(%arg0: i32) -> (i32, i32) {
    %c0_i32 = arith.constant 0 : i32
    %c0_i32_0 = arith.constant 0 : i32
    %c0_i32_1 = arith.constant 0 : i32
    return %c0_i32, %c0_i32_0 : i32, i32
  }
  func.func @transform_1(%arg0: i32) -> (i32, i32, i32) {
    %c0_i32 = arith.constant 0 : i32
    %c0_i32_0 = arith.constant 0 : i32
    %c0_i32_1 = arith.constant 0 : i32
    return %arg0, %c0_i32, %c0_i32_0 : i32, i32, i32
  }
  func.func @transform_2(%arg0: i32) -> (i32, i32) {
    %c0_i32 = arith.constant 0 : i32
    %c0_i32_0 = arith.constant 0 : i32
    %c0_i32_1 = arith.constant 0 : i32
    return %c0_i32, %c0_i32_0 : i32, i32
  }
  func.func @transform_3(%arg0: i32) -> (i32, i32) {
    %c0_i32 = arith.constant 0 : i32
    %c0_i32_0 = arith.constant 0 : i32
    %c0_i32_1 = arith.constant 0 : i32
    return %c0_i32, %c0_i32_0 : i32, i32
  }
  func.func @transform_4(%arg0: i32) -> (i32, i32) {
    %c0_i32 = arith.constant 0 : i32
    %c0_i32_0 = arith.constant 0 : i32
    %c0_i32_1 = arith.constant 0 : i32
    return %c0_i32, %c0_i32_0 : i32, i32
  }
  func.func @transform_5(%arg0: i32) -> (i32, i32) {
    %c0_i32 = arith.constant 0 : i32
    %c0_i32_0 = arith.constant 0 : i32
    %c0_i32_1 = arith.constant 0 : i32
    return %c0_i32, %c0_i32_0 : i32, i32
  }
  func.func @transform_6(%arg0: i32) -> (i32, i32) {
    %c0_i32 = arith.constant 0 : i32
    %c0_i32_0 = arith.constant 0 : i32
    %c0_i32_1 = arith.constant 0 : i32
    return %c0_i32, %c0_i32_0 : i32, i32
  }
  func.func @transform_7(%arg0: i32) -> (i32, i32) {
    %c0_i32 = arith.constant 0 : i32
    %c0_i32_0 = arith.constant 0 : i32
    %c0_i32_1 = arith.constant 0 : i32
    return %c0_i32, %c0_i32_0 : i32, i32
  }
  func.func @transform_8(%arg0: i32) -> (i32, i32) {
    %c0_i32 = arith.constant 0 : i32
    %c0_i32_0 = arith.constant 0 : i32
    %c0_i32_1 = arith.constant 0 : i32
    return %c0_i32, %c0_i32_0 : i32, i32
  }
  func.func @transform_9(%arg0: i32) -> (i32, i32) {
    %c0_i32 = arith.constant 0 : i32
    %c0_i32_0 = arith.constant 0 : i32
    %c0_i32_1 = arith.constant 0 : i32
    return %c0_i32, %c0_i32_0 : i32, i32
  }
  func.func @transform_10(%arg0: i32) -> (i32, i32) {
    %c0_i32 = arith.constant 0 : i32
    %c0_i32_0 = arith.constant 0 : i32
    %c0_i32_1 = arith.constant 0 : i32
    return %c0_i32, %c0_i32_0 : i32, i32
  }
  func.func @transform_11(%arg0: i32) -> (i32, i32) {
    %c0_i32 = arith.constant 0 : i32
    %c0_i32_0 = arith.constant 0 : i32
    %c0_i32_1 = arith.constant 0 : i32
    return %c0_i32, %c0_i32_0 : i32, i32
  }
  func.func @transform_12(%arg0: i32) -> (i32, i32) {
    %c0_i32 = arith.constant 0 : i32
    %c0_i32_0 = arith.constant 0 : i32
    %c0_i32_1 = arith.constant 0 : i32
    return %c0_i32, %c0_i32_0 : i32, i32
  }
  func.func @transform_13(%arg0: i32) -> (i32, i32) {
    %c0_i32 = arith.constant 0 : i32
    %c0_i32_0 = arith.constant 0 : i32
    %c0_i32_1 = arith.constant 0 : i32
    return %c0_i32, %c0_i32_0 : i32, i32
  }
  func.func @transform_14(%arg0: i32) -> (i32, i32) {
    %c0_i32 = arith.constant 0 : i32
    %c0_i32_0 = arith.constant 0 : i32
    %c0_i32_1 = arith.constant 0 : i32
    return %c0_i32, %c0_i32_0 : i32, i32
  }
  func.func @transform_15(%arg0: i32) -> (i32, i32) {
    %c0_i32 = arith.constant 0 : i32
    %c0_i32_0 = arith.constant 0 : i32
    %c0_i32_1 = arith.constant 0 : i32
    return %c0_i32, %c0_i32_0 : i32, i32
  }
  func.func @transform_16(%arg0: i32) -> (i32, i32, i32) {
    %c0_i32 = arith.constant 0 : i32
    %c0_i32_0 = arith.constant 0 : i32
    %c0_i32_1 = arith.constant 0 : i32
    return %arg0, %c0_i32, %c0_i32_0 : i32, i32, i32
  }
}

</mosaic_0001>

<llo_original>
// kernel: tpu_custom_call.1
$region0: #{tpu_custom_call.1}
  #allocation0 [shape = 'u32[]', space=smem, size = 0x4, offset = 0x4, fixed_abs, tag = 'smem constant byte address 0x4 - core index']
  #allocation1 [shape = 'u32[144,128]{1,0:T(1,128)}', space=vmem, size = 0x12000, scoped, tag = 'internal scratch']
  #allocation2 [shape = 'f32[16,32]{1,0:T(8,128)}', space=vmem, size = 0x2000, scoped, tag = 'scratch operand']
  %s0 = inlined_call_operand.hbm [shape: bf16[16,16], index: 0, kind: input, shape index: {}]
  %s1 = inlined_call_operand.hbm [shape: bf16[4,16,32], index: 1, kind: input, shape index: {}]
  %s2 = inlined_call_operand.hbm [shape: bf16[32,32], index: 2, kind: input, shape index: {}]
  %s3 = inlined_call_operand.hbm [shape: bf16[32,32], index: 3, kind: input, shape index: {}]
  %s4 = inlined_call_operand.hbm [shape: bf16[32,32], index: 4, kind: input, shape index: {}]
  %s5 = inlined_call_operand.hbm [shape: bf16[32,64], index: 5, kind: input, shape index: {}]
  %s6 = inlined_call_operand.hbm [shape: bf16[32,32], index: 6, kind: input, shape index: {}]
  %s7 = inlined_call_operand.hbm [shape: bf16[32,32], index: 7, kind: input, shape index: {}]
  %s8 = inlined_call_operand.hbm [shape: bf16[32,32], index: 8, kind: input, shape index: {}]
  %s9 = inlined_call_operand.vmem [shape: bf16[32,32], index: 9, kind: input, shape index: {}]
  %s10 = inlined_call_operand.vmem [shape: f32[1,32], index: 10, kind: input, shape index: {}]
  %s11 = inlined_call_operand.vmem [shape: f32[1,32], index: 11, kind: input, shape index: {}]
  %s12 = inlined_call_operand.vmem [shape: f32[1,64], index: 12, kind: input, shape index: {}]
  %s13 = inlined_call_operand.vmem [shape: f32[1,32], index: 13, kind: input, shape index: {}]
  %s14 = inlined_call_operand.vmem [shape: f32[1,32], index: 14, kind: input, shape index: {}]
  %s15 = inlined_call_operand.vmem [shape: f32[1,32], index: 15, kind: input, shape index: {}]
  %s16 = inlined_call_operand.hbm [shape: f32[4,16,32], index: 16, kind: output, shape index: {}]
  %s17 = sld [smem:[#allocation0]]
  $region137: #{tpu_custom_call.1} parent=0
    _
  %s19 = ssub.s32 1, %s17
  %s20 = scalar_select 0, %s19, %s17
  $region1: #{tpu_custom_call.1} parent=0
    #allocation3 [shape = 'u8[4096]{0}', space=vmem, size = 0x1000, scoped, tag = 'input window, operand 0, single buffered']
    #allocation4 [shape = 's32[2]{0}', space=sflag, size = 0x8, scoped, tag = 'scoped memory for tpu_custom_call.1']
    #allocation5 [shape = 's32[2]{0}', space=sflag, size = 0x8, scoped, tag = 'scoped memory for tpu_custom_call.1']
    #allocation6 [shape = 'u8[8192]{0}', space=vmem, size = 0x2000, scoped, tag = 'input window, operand 1']
    #allocation7 [shape = 's32[2]{0}', space=sflag, size = 0x8, scoped, tag = 'scoped memory for tpu_custom_call.1']
    #allocation8 [shape = 'u8[8192]{0}', space=vmem, size = 0x2000, scoped, tag = 'input window, operand 2, single buffered']
    #allocation9 [shape = 'u8[8192]{0}', space=vmem, size = 0x2000, scoped, tag = 'input window, operand 3, single buffered']
    #allocation10 [shape = 's32[1]{0}', space=sflag, size = 0x4, scoped, tag = 'scoped memory for tpu_custom_call.1']
    #allocation11 [shape = 'u8[8192]{0}', space=vmem, size = 0x2000, scoped, tag = 'input window, operand 4, single buffered']
    #allocation12 [shape = 'u8[8192]{0}', space=vmem, size = 0x2000, scoped, tag = 'input window, operand 5, single buffered']
    #allocation13 [shape = 's32[1]{0}', space=sflag, size = 0x4, scoped, tag = 'scoped memory for tpu_custom_call.1']
    #allocation14 [shape = 'u8[8192]{0}', space=vmem, size = 0x2000, scoped, tag = 'input window, operand 6, single buffered']
    #allocation15 [shape = 'u8[8192]{0}', space=vmem, size = 0x2000, scoped, tag = 'input window, operand 7, single buffered']
    #allocation16 [shape = 's32[1]{0}', space=sflag, size = 0x4, scoped, tag = 'scoped memory for tpu_custom_call.1']
    #allocation17 [shape = 'u8[8192]{0}', space=vmem, size = 0x2000, scoped, tag = 'input window, operand 8, single buffered']
    #allocation18 [shape = 'u8[16384]{0}', space=vmem, size = 0x4000, scoped, tag = 'output window, operand 0']
    %21 = vsyncpa [#allocation4], 0
    %22 = vsyncpa [#allocation7], 0
    %s23 = scalar_lea.sflag [#allocation7], 1
    %24 = vsyncpa %s23, 0
    %25 = vsyncpa [#allocation10], 0
    %26 = vsyncpa [#allocation13], 0
    %27 = vsyncpa [#allocation16], 0
    %28 = vsyncpa [#allocation5], 0
    %s29 = scalar_lea.sflag [#allocation5], 1
    %30 = vsyncpa %s29, 0
    loop: start=0, step=1, limit=6
    $region2: #{tpu_custom_call.1} parent=1 // loop_pre_header
      _
    $region3: #{tpu_custom_call.1} parent=1 // loop_header
      %s32 = sphi 0, %s36
      %p33 = scmp.ge.s32.totalorder %s32, 6
      %s40 = sphi 0, %s40
      %s42 = sphi 0, %s40
      %s43 = sphi 0, %s42
      %s57 = sphi 0, %s43
      %s63 = sphi 0, %s65
      %s66 = sphi 0, %s63
      %s67 = sphi 0, %s66
      %s83 = sphi 0, %s67
      %s87 = sphi 0, %s87
      %s89 = sphi 0, %s87
      %s90 = sphi 0, %s89
      %s104 = sphi 0, %s90
      %s108 = sphi 0, %s108
      %s110 = sphi 0, %s108
      %s111 = sphi 0, %s110
      %s125 = sphi 0, %s111
      %s129 = sphi 0, %s129
      %s131 = sphi 0, %s129
      %s132 = sphi 0, %s131
      %s146 = sphi 0, %s132
      %s150 = sphi 0, %s150
      %s152 = sphi 0, %s150
      %s153 = sphi 0, %s152
      %s167 = sphi 0, %s153
      %s171 = sphi 0, %s171
      %s173 = sphi 0, %s171
      %s174 = sphi 0, %s173
      %s188 = sphi 0, %s174
      %s192 = sphi 0, %s192
      %s194 = sphi 0, %s192
      %s195 = sphi 0, %s194
      %s209 = sphi 0, %s195
      %s213 = sphi 0, %s213
      %s215 = sphi 0, %s213
      %s216 = sphi 0, %s215
      %s230 = sphi 0, %s216
      %s234 = sphi 0, %s234
      %s236 = sphi 0, %s234
      %s237 = sphi 0, %s236
      %s251 = sphi 0, %s237
      %s255 = sphi 0, %s255
      %s257 = sphi 0, %s255
      %s258 = sphi 0, %s257
      %s272 = sphi 0, %s258
      %s276 = sphi 0, %s276
      %s278 = sphi 0, %s276
      %s279 = sphi 0, %s278
      %s293 = sphi 0, %s279
      %s297 = sphi 0, %s297
      %s299 = sphi 0, %s297
      %s300 = sphi 0, %s299
      %s314 = sphi 0, %s300
      %s318 = sphi 0, %s318
      %s320 = sphi 0, %s318
      %s321 = sphi 0, %s320
      %s335 = sphi 0, %s321
      %s339 = sphi 0, %s339
      %s341 = sphi 0, %s339
      %s342 = sphi 0, %s341
      %s356 = sphi 0, %s342
      %s360 = sphi 0, %s360
      %s362 = sphi 0, %s360
      %s363 = sphi 0, %s362
      %s377 = sphi 0, %s363
      %s383 = sphi 0, %s385
      %s386 = sphi 0, %s383
      %s387 = sphi 0, %s386
      %s403 = sphi 0, %s387
    $region4: #{tpu_custom_call.1} parent=1 // loop_header_branch
      %35 = sbr.rel (%p33) target = $region8
    $region5: #{tpu_custom_call.1} parent=1 // loop_body
      %s37 = ssub.s32 %s32, 1
      %s38 = ssub.s32 %s32, 2
      %s39 = sadd.s32 %s32, 1
      %s41 = sadd.s32 %s40, 1
      %p44 = scmp.eq.s32.totalorder %s32, 3
      %p45 = scmp.ne.s32.totalorder %s40, %s42
      %p46 = scmp.eq.s32.totalorder %s32, 0
      %p47 = por %p45, %p46
      %p48 = scmp.ne.s32.totalorder %s40, %s42
      %p49 = scmp.eq.s32.totalorder %s37, 3
      %p50 = por %p48, %p49
      %p51 = scmp.ne.s32.totalorder %s42, %s43
      %p52 = scmp.eq.s32.totalorder %s37, 0
      %p53 = por %p51, %p52
      %p54 = scmp.ne.s32.totalorder %s42, %s43
      %p55 = scmp.eq.s32.totalorder %s38, 3
      %p56 = por %p54, %p55
      %p58 = scmp.ne.s32.totalorder %s43, %s57
      %p59 = scmp.eq.s32.totalorder %s38, 0
      %p60 = por %p58, %p59
      %s61 = ssub.s32 %s32, %s39
      %p62 = scmp.eq.s32.totalorder %s61, 0
      %s64 = sadd.s32 %s63, 1
      %s65 = scalar_select %p62, %s63, %s64
      %p68 = pneg %p62
      %p69 = scmp.eq.s32.totalorder %s32, 3
      %p70 = por %p68, %p69
      %p71 = scmp.ne.s32.totalorder %s63, %s66
      %p72 = scmp.eq.s32.totalorder %s32, 0
      %p73 = por %p71, %p72
      %p74 = scmp.ne.s32.totalorder %s63, %s66
      %p75 = scmp.eq.s32.totalorder %s37, 3
      %p76 = por %p74, %p75
      %p77 = scmp.ne.s32.totalorder %s66, %s67
      %p78 = scmp.eq.s32.totalorder %s37, 0
      %p79 = por %p77, %p78
      %p80 = scmp.ne.s32.totalorder %s66, %s67
      %p81 = scmp.eq.s32.totalorder %s38, 3
      %p82 = por %p80, %p81
      %p84 = scmp.ne.s32.totalorder %s67, %s83
      %p85 = scmp.eq.s32.totalorder %s38, 0
      %p86 = por %p84, %p85
      %s88 = sadd.s32 %s87, 1
      %p91 = scmp.eq.s32.totalorder %s32, 3
      %p92 = scmp.ne.s32.totalorder %s87, %s89
      %p93 = scmp.eq.s32.totalorder %s32, 0
      %p94 = por %p92, %p93
      %p95 = scmp.ne.s32.totalorder %s87, %s89
      %p96 = scmp.eq.s32.totalorder %s37, 3
      %p97 = por %p95, %p96
      %p98 = scmp.ne.s32.totalorder %s89, %s90
      %p99 = scmp.eq.s32.totalorder %s37, 0
      %p100 = por %p98, %p99
      %p101 = scmp.ne.s32.totalorder %s89, %s90
      %p102 = scmp.eq.s32.totalorder %s38, 3
      %p103 = por %p101, %p102
      %p105 = scmp.ne.s32.totalorder %s90, %s104
      %p106 = scmp.eq.s32.totalorder %s38, 0
      %p107 = por %p105, %p106
      %s109 = sadd.s32 %s108, 1
      %p112 = scmp.eq.s32.totalorder %s32, 3
      %p113 = scmp.ne.s32.totalorder %s108, %s110
      %p114 = scmp.eq.s32.totalorder %s32, 0
      %p115 = por %p113, %p114
      %p116 = scmp.ne.s32.totalorder %s108, %s110
      %p117 = scmp.eq.s32.totalorder %s37, 3
      %p118 = por %p116, %p117
      %p119 = scmp.ne.s32.totalorder %s110, %s111
      %p120 = scmp.eq.s32.totalorder %s37, 0
      %p121 = por %p119, %p120
      %p122 = scmp.ne.s32.totalorder %s110, %s111
      %p123 = scmp.eq.s32.totalorder %s38, 3
      %p124 = por %p122, %p123
      %p126 = scmp.ne.s32.totalorder %s111, %s125
      %p127 = scmp.eq.s32.totalorder %s38, 0
      %p128 = por %p126, %p127
      %s130 = sadd.s32 %s129, 1
      %p133 = scmp.eq.s32.totalorder %s32, 3
      %p134 = scmp.ne.s32.totalorder %s129, %s131
      %p135 = scmp.eq.s32.totalorder %s32, 0
      %p136 = por %p134, %p135
      %p137 = scmp.ne.s32.totalorder %s129, %s131
      %p138 = scmp.eq.s32.totalorder %s37, 3
      %p139 = por %p137, %p138
      %p140 = scmp.ne.s32.totalorder %s131, %s132
      %p141 = scmp.eq.s32.totalorder %s37, 0
      %p142 = por %p140, %p141
      %p143 = scmp.ne.s32.totalorder %s131, %s132
      %p144 = scmp.eq.s32.totalorder %s38, 3
      %p145 = por %p143, %p144
      %p147 = scmp.ne.s32.totalorder %s132, %s146
      %p148 = scmp.eq.s32.totalorder %s38, 0
      %p149 = por %p147, %p148
      %s151 = sadd.s32 %s150, 1
      %p154 = scmp.eq.s32.totalorder %s32, 3
      %p155 = scmp.ne.s32.totalorder %s150, %s152
      %p156 = scmp.eq.s32.totalorder %s32, 0
      %p157 = por %p155, %p156
      %p158 = scmp.ne.s32.totalorder %s150, %s152
      %p159 = scmp.eq.s32.totalorder %s37, 3
      %p160 = por %p158, %p159
      %p161 = scmp.ne.s32.totalorder %s152, %s153
      %p162 = scmp.eq.s32.totalorder %s37, 0
      %p163 = por %p161, %p162
      %p164 = scmp.ne.s32.totalorder %s152, %s153
      %p165 = scmp.eq.s32.totalorder %s38, 3
      %p166 = por %p164, %p165
      %p168 = scmp.ne.s32.totalorder %s153, %s167
      %p169 = scmp.eq.s32.totalorder %s38, 0
      %p170 = por %p168, %p169
      %s172 = sadd.s32 %s171, 1
      %p175 = scmp.eq.s32.totalorder %s32, 3
      %p176 = scmp.ne.s32.totalorder %s171, %s173
      %p177 = scmp.eq.s32.totalorder %s32, 0
      %p178 = por %p176, %p177
      %p179 = scmp.ne.s32.totalorder %s171, %s173
      %p180 = scmp.eq.s32.totalorder %s37, 3
      %p181 = por %p179, %p180
      %p182 = scmp.ne.s32.totalorder %s173, %s174
      %p183 = scmp.eq.s32.totalorder %s37, 0
      %p184 = por %p182, %p183
      %p185 = scmp.ne.s32.totalorder %s173, %s174
      %p186 = scmp.eq.s32.totalorder %s38, 3
      %p187 = por %p185, %p186
      %p189 = scmp.ne.s32.totalorder %s174, %s188
      %p190 = scmp.eq.s32.totalorder %s38, 0
      %p191 = por %p189, %p190
      %s193 = sadd.s32 %s192, 1
      %p196 = scmp.eq.s32.totalorder %s32, 3
      %p197 = scmp.ne.s32.totalorder %s192, %s194
      %p198 = scmp.eq.s32.totalorder %s32, 0
      %p199 = por %p197, %p198
      %p200 = scmp.ne.s32.totalorder %s192, %s194
      %p201 = scmp.eq.s32.totalorder %s37, 3
      %p202 = por %p200, %p201
      %p203 = scmp.ne.s32.totalorder %s194, %s195
      %p204 = scmp.eq.s32.totalorder %s37, 0
      %p205 = por %p203, %p204
      %p206 = scmp.ne.s32.totalorder %s194, %s195
      %p207 = scmp.eq.s32.totalorder %s38, 3
      %p208 = por %p206, %p207
      %p210 = scmp.ne.s32.totalorder %s195, %s209
      %p211 = scmp.eq.s32.totalorder %s38, 0
      %p212 = por %p210, %p211
      %s214 = sadd.s32 %s213, 1
      %p217 = scmp.eq.s32.totalorder %s32, 3
      %p218 = scmp.ne.s32.totalorder %s213, %s215
      %p219 = scmp.eq.s32.totalorder %s32, 0
      %p220 = por %p218, %p219
      %p221 = scmp.ne.s32.totalorder %s213, %s215
      %p222 = scmp.eq.s32.totalorder %s37, 3
      %p223 = por %p221, %p222
      %p224 = scmp.ne.s32.totalorder %s215, %s216
      %p225 = scmp.eq.s32.totalorder %s37, 0
      %p226 = por %p224, %p225
      %p227 = scmp.ne.s32.totalorder %s215, %s216
      %p228 = scmp.eq.s32.totalorder %s38, 3
      %p229 = por %p227, %p228
      %p231 = scmp.ne.s32.totalorder %s216, %s230
      %p232 = scmp.eq.s32.totalorder %s38, 0
      %p233 = por %p231, %p232
      %s235 = sadd.s32 %s234, 1
      %p238 = scmp.eq.s32.totalorder %s32, 3
      %p239 = scmp.ne.s32.totalorder %s234, %s236
      %p240 = scmp.eq.s32.totalorder %s32, 0
      %p241 = por %p239, %p240
      %p242 = scmp.ne.s32.totalorder %s234, %s236
      %p243 = scmp.eq.s32.totalorder %s37, 3
      %p244 = por %p242, %p243
      %p245 = scmp.ne.s32.totalorder %s236, %s237
      %p246 = scmp.eq.s32.totalorder %s37, 0
      %p247 = por %p245, %p246
      %p248 = scmp.ne.s32.totalorder %s236, %s237
      %p249 = scmp.eq.s32.totalorder %s38, 3
      %p250 = por %p248, %p249
      %p252 = scmp.ne.s32.totalorder %s237, %s251
      %p253 = scmp.eq.s32.totalorder %s38, 0
      %p254 = por %p252, %p253
      %s256 = sadd.s32 %s255, 1
      %p259 = scmp.eq.s32.totalorder %s32, 3
      %p260 = scmp.ne.s32.totalorder %s255, %s257
      %p261 = scmp.eq.s32.totalorder %s32, 0
      %p262 = por %p260, %p261
      %p263 = scmp.ne.s32.totalorder %s255, %s257
      %p264 = scmp.eq.s32.totalorder %s37, 3
      %p265 = por %p263, %p264
      %p266 = scmp.ne.s32.totalorder %s257, %s258
      %p267 = scmp.eq.s32.totalorder %s37, 0
      %p268 = por %p266, %p267
      %p269 = scmp.ne.s32.totalorder %s257, %s258
      %p270 = scmp.eq.s32.totalorder %s38, 3
      %p271 = por %p269, %p270
      %p273 = scmp.ne.s32.totalorder %s258, %s272
      %p274 = scmp.eq.s32.totalorder %s38, 0
      %p275 = por %p273, %p274
      %s277 = sadd.s32 %s276, 1
      %p280 = scmp.eq.s32.totalorder %s32, 3
      %p281 = scmp.ne.s32.totalorder %s276, %s278
      %p282 = scmp.eq.s32.totalorder %s32, 0
      %p283 = por %p281, %p282
      %p284 = scmp.ne.s32.totalorder %s276, %s278
      %p285 = scmp.eq.s32.totalorder %s37, 3
      %p286 = por %p284, %p285
      %p287 = scmp.ne.s32.totalorder %s278, %s279
      %p288 = scmp.eq.s32.totalorder %s37, 0
      %p289 = por %p287, %p288
      %p290 = scmp.ne.s32.totalorder %s278, %s279
      %p291 = scmp.eq.s32.totalorder %s38, 3
      %p292 = por %p290, %p291
      %p294 = scmp.ne.s32.totalorder %s279, %s293
      %p295 = scmp.eq.s32.totalorder %s38, 0
      %p296 = por %p294, %p295
      %s298 = sadd.s32 %s297, 1
      %p301 = scmp.eq.s32.totalorder %s32, 3
      %p302 = scmp.ne.s32.totalorder %s297, %s299
      %p303 = scmp.eq.s32.totalorder %s32, 0
      %p304 = por %p302, %p303
      %p305 = scmp.ne.s32.totalorder %s297, %s299
      %p306 = scmp.eq.s32.totalorder %s37, 3
      %p307 = por %p305, %p306
      %p308 = scmp.ne.s32.totalorder %s299, %s300
      %p309 = scmp.eq.s32.totalorder %s37, 0
      %p310 = por %p308, %p309
      %p311 = scmp.ne.s32.totalorder %s299, %s300
      %p312 = scmp.eq.s32.totalorder %s38, 3
      %p313 = por %p311, %p312
      %p315 = scmp.ne.s32.totalorder %s300, %s314
      %p316 = scmp.eq.s32.totalorder %s38, 0
      %p317 = por %p315, %p316
      %s319 = sadd.s32 %s318, 1
      %p322 = scmp.eq.s32.totalorder %s32, 3
      %p323 = scmp.ne.s32.totalorder %s318, %s320
      %p324 = scmp.eq.s32.totalorder %s32, 0
      %p325 = por %p323, %p324
      %p326 = scmp.ne.s32.totalorder %s318, %s320
      %p327 = scmp.eq.s32.totalorder %s37, 3
      %p328 = por %p326, %p327
      %p329 = scmp.ne.s32.totalorder %s320, %s321
      %p330 = scmp.eq.s32.totalorder %s37, 0
      %p331 = por %p329, %p330
      %p332 = scmp.ne.s32.totalorder %s320, %s321
      %p333 = scmp.eq.s32.totalorder %s38, 3
      %p334 = por %p332, %p333
      %p336 = scmp.ne.s32.totalorder %s321, %s335
      %p337 = scmp.eq.s32.totalorder %s38, 0
      %p338 = por %p336, %p337
      %s340 = sadd.s32 %s339, 1
      %p343 = scmp.eq.s32.totalorder %s32, 3
      %p344 = scmp.ne.s32.totalorder %s339, %s341
      %p345 = scmp.eq.s32.totalorder %s32, 0
      %p346 = por %p344, %p345
      %p347 = scmp.ne.s32.totalorder %s339, %s341
      %p348 = scmp.eq.s32.totalorder %s37, 3
      %p349 = por %p347, %p348
      %p350 = scmp.ne.s32.totalorder %s341, %s342
      %p351 = scmp.eq.s32.totalorder %s37, 0
      %p352 = por %p350, %p351
      %p353 = scmp.ne.s32.totalorder %s341, %s342
      %p354 = scmp.eq.s32.totalorder %s38, 3
      %p355 = por %p353, %p354
      %p357 = scmp.ne.s32.totalorder %s342, %s356
      %p358 = scmp.eq.s32.totalorder %s38, 0
      %p359 = por %p357, %p358
      %s361 = sadd.s32 %s360, 1
      %p364 = scmp.eq.s32.totalorder %s32, 3
      %p365 = scmp.ne.s32.totalorder %s360, %s362
      %p366 = scmp.eq.s32.totalorder %s32, 0
      %p367 = por %p365, %p366
      %p368 = scmp.ne.s32.totalorder %s360, %s362
      %p369 = scmp.eq.s32.totalorder %s37, 3
      %p370 = por %p368, %p369
      %p371 = scmp.ne.s32.totalorder %s362, %s363
      %p372 = scmp.eq.s32.totalorder %s37, 0
      %p373 = por %p371, %p372
      %p374 = scmp.ne.s32.totalorder %s362, %s363
      %p375 = scmp.eq.s32.totalorder %s38, 3
      %p376 = por %p374, %p375
      %p378 = scmp.ne.s32.totalorder %s363, %s377
      %p379 = scmp.eq.s32.totalorder %s38, 0
      %p380 = por %p378, %p379
      %s381 = ssub.s32 %s32, %s39
      %p382 = scmp.eq.s32.totalorder %s381, 0
      %s384 = sadd.s32 %s383, 1
      %s385 = scalar_select %p382, %s383, %s384
      %p388 = pneg %p382
      %p389 = scmp.eq.s32.totalorder %s32, 3
      %p390 = por %p388, %p389
      %p391 = scmp.ne.s32.totalorder %s383, %s386
      %p392 = scmp.eq.s32.totalorder %s32, 0
      %p393 = por %p391, %p392
      %p394 = scmp.ne.s32.totalorder %s383, %s386
      %p395 = scmp.eq.s32.totalorder %s37, 3
      %p396 = por %p394, %p395
      %p397 = scmp.ne.s32.totalorder %s386, %s387
      %p398 = scmp.eq.s32.totalorder %s37, 0
      %p399 = por %p397, %p398
      %p400 = scmp.ne.s32.totalorder %s386, %s387
      %p401 = scmp.eq.s32.totalorder %s38, 3
      %p402 = por %p400, %p401
      %p404 = scmp.ne.s32.totalorder %s387, %s403
      %p405 = scmp.eq.s32.totalorder %s38, 0
      %p406 = por %p404, %p405
      %p407 = scmp.le.s32.totalorder 1, %s32
      %p408 = scmp.lt.s32.totalorder %s32, 5
      %p409 = pnand %p407, %p408
      %p410 = pneg %p409
      // Predicated region
      $region9: #{tpu_custom_call.1} parent=5 // pred_check
        _
      $region10: #{tpu_custom_call.1} parent=5 // pred_check_branch
        %412 = sbr.rel (%p409) target = $region12
      $region11: #{tpu_custom_call.1} parent=5 // pred_region
        %s413 = ssub.s32 %s32, 1
        // Predicated region
        $region13: #{tpu_custom_call.1} parent=11 // pred_check
          %p414 = pneg %p53
        $region14: #{tpu_custom_call.1} parent=11 // pred_check_branch
          %416 = sbr.rel (%p414) target = $region16
        $region15: #{tpu_custom_call.1} parent=11 // pred_region
          %s418 = ssub.s32 128, 128
          %419 = vsyncadd [#allocation4], %s418
          %s420 = sshll.u32 [#allocation3], 4
          %s421 = int_to_ptr.vmem [resolvable:$true] %s420
          %426 = dma.hbm_to_vmem [thread:$0]  %s0, 128, %s421, [#allocation4], 64, 64, 4
        $region16: #{tpu_custom_call.1} parent=11 // pred_fallthru
          _
        // Predicated region
        $region17: #{tpu_custom_call.1} parent=11 // pred_check
          %p427 = pneg %p100
        $region18: #{tpu_custom_call.1} parent=11 // pred_check_branch
          %429 = sbr.rel (%p427) target = $region20
        $region19: #{tpu_custom_call.1} parent=11 // pred_region
          %s431 = ssub.s32 256, 256
          %432 = vsyncadd [#allocation7], %s431
          %s433 = sshll.u32 [#allocation8], 4
          %s434 = int_to_ptr.vmem [resolvable:$true] %s433
          %439 = dma.hbm_to_vmem [thread:$0]  %s2, 256, %s434, [#allocation7], 64, 64, 4
        $region20: #{tpu_custom_call.1} parent=11 // pred_fallthru
          _
        // Predicated region
        $region21: #{tpu_custom_call.1} parent=11 // pred_check
          %p440 = pneg %p121
        $region22: #{tpu_custom_call.1} parent=11 // pred_check_branch
          %442 = sbr.rel (%p440) target = $region24
        $region23: #{tpu_custom_call.1} parent=11 // pred_region
          %s444 = ssub.s32 256, 256
          %445 = vsyncadd [#allocation10], %s444
          %s446 = sshll.u32 [#allocation9], 4
          %s447 = int_to_ptr.vmem [resolvable:$true] %s446
          %452 = dma.hbm_to_vmem [thread:$0]  %s3, 256, %s447, [#allocation10], 64, 64, 4
        $region24: #{tpu_custom_call.1} parent=11 // pred_fallthru
          _
        // Predicated region
        $region25: #{tpu_custom_call.1} parent=11 // pred_check
          %p453 = pneg %p142
        $region26: #{tpu_custom_call.1} parent=11 // pred_check_branch
          %455 = sbr.rel (%p453) target = $region28
        $region27: #{tpu_custom_call.1} parent=11 // pred_region
          %s457 = ssub.s32 256, 256
          %458 = vsyncadd [#allocation10], %s457
          %s459 = sshll.u32 [#allocation11], 4
          %s460 = int_to_ptr.vmem [resolvable:$true] %s459
          %465 = dma.hbm_to_vmem [thread:$0]  %s4, 256, %s460, [#allocation10], 64, 64, 4
        $region28: #{tpu_custom_call.1} parent=11 // pred_fallthru
          _
        // Predicated region
        $region29: #{tpu_custom_call.1} parent=11 // pred_check
          %p466 = pneg %p163
        $region30: #{tpu_custom_call.1} parent=11 // pred_check_branch
          %468 = sbr.rel (%p466) target = $region32
        $region31: #{tpu_custom_call.1} parent=11 // pred_region
          %s470 = ssub.s32 256, 256
          %471 = vsyncadd [#allocation13], %s470
          %s472 = sshll.u32 [#allocation12], 4
          %s473 = int_to_ptr.vmem [resolvable:$true] %s472
          %478 = dma.hbm_to_vmem [thread:$0]  %s5, 256, %s473, [#allocation13], 64, 64, 4
        $region32: #{tpu_custom_call.1} parent=11 // pred_fallthru
          _
        // Predicated region
        $region33: #{tpu_custom_call.1} parent=11 // pred_check
          %p479 = pneg %p184
        $region34: #{tpu_custom_call.1} parent=11 // pred_check_branch
          %481 = sbr.rel (%p479) target = $region36
        $region35: #{tpu_custom_call.1} parent=11 // pred_region
          %s483 = ssub.s32 256, 256
          %484 = vsyncadd [#allocation13], %s483
          %s485 = sshll.u32 [#allocation14], 4
          %s486 = int_to_ptr.vmem [resolvable:$true] %s485
          %491 = dma.hbm_to_vmem [thread:$0]  %s6, 256, %s486, [#allocation13], 64, 64, 4
        $region36: #{tpu_custom_call.1} parent=11 // pred_fallthru
          _
        // Predicated region
        $region37: #{tpu_custom_call.1} parent=11 // pred_check
          %p492 = pneg %p205
        $region38: #{tpu_custom_call.1} parent=11 // pred_check_branch
          %494 = sbr.rel (%p492) target = $region40
        $region39: #{tpu_custom_call.1} parent=11 // pred_region
          %s496 = ssub.s32 256, 256
          %497 = vsyncadd [#allocation16], %s496
          %s498 = sshll.u32 [#allocation15], 4
          %s499 = int_to_ptr.vmem [resolvable:$true] %s498
          %504 = dma.hbm_to_vmem [thread:$0]  %s7, 256, %s499, [#allocation16], 64, 64, 4
        $region40: #{tpu_custom_call.1} parent=11 // pred_fallthru
          _
        // Predicated region
        $region41: #{tpu_custom_call.1} parent=11 // pred_check
          %p505 = pneg %p226
        $region42: #{tpu_custom_call.1} parent=11 // pred_check_branch
          %507 = sbr.rel (%p505) target = $region44
        $region43: #{tpu_custom_call.1} parent=11 // pred_region
          %s509 = ssub.s32 256, 256
          %510 = vsyncadd [#allocation16], %s509
          %s511 = sshll.u32 [#allocation17], 4
          %s512 = int_to_ptr.vmem [resolvable:$true] %s511
          %517 = dma.hbm_to_vmem [thread:$0]  %s8, 256, %s512, [#allocation16], 64, 64, 4
        $region44: #{tpu_custom_call.1} parent=11 // pred_fallthru
          _
        // Predicated region
        $region45: #{tpu_custom_call.1} parent=11 // pred_check
          %p518 = pneg %p247
        $region46: #{tpu_custom_call.1} parent=11 // pred_check_branch
          %520 = sbr.rel (%p518) target = $region48
        $region47: #{tpu_custom_call.1} parent=11 // pred_region
          _
        $region48: #{tpu_custom_call.1} parent=11 // pred_fallthru
          _
        // Predicated region
        $region49: #{tpu_custom_call.1} parent=11 // pred_check
          %p521 = pneg %p268
        $region50: #{tpu_custom_call.1} parent=11 // pred_check_branch
          %523 = sbr.rel (%p521) target = $region52
        $region51: #{tpu_custom_call.1} parent=11 // pred_region
          _
        $region52: #{tpu_custom_call.1} parent=11 // pred_fallthru
          _
        // Predicated region
        $region53: #{tpu_custom_call.1} parent=11 // pred_check
          %p524 = pneg %p289
        $region54: #{tpu_custom_call.1} parent=11 // pred_check_branch
          %526 = sbr.rel (%p524) target = $region56
        $region55: #{tpu_custom_call.1} parent=11 // pred_region
          _
        $region56: #{tpu_custom_call.1} parent=11 // pred_fallthru
          _
        // Predicated region
        $region57: #{tpu_custom_call.1} parent=11 // pred_check
          %p527 = pneg %p310
        $region58: #{tpu_custom_call.1} parent=11 // pred_check_branch
          %529 = sbr.rel (%p527) target = $region60
        $region59: #{tpu_custom_call.1} parent=11 // pred_region
          _
        $region60: #{tpu_custom_call.1} parent=11 // pred_fallthru
          _
        // Predicated region
        $region61: #{tpu_custom_call.1} parent=11 // pred_check
          %p530 = pneg %p331
        $region62: #{tpu_custom_call.1} parent=11 // pred_check_branch
          %532 = sbr.rel (%p530) target = $region64
        $region63: #{tpu_custom_call.1} parent=11 // pred_region
          _
        $region64: #{tpu_custom_call.1} parent=11 // pred_fallthru
          _
        // Predicated region
        $region65: #{tpu_custom_call.1} parent=11 // pred_check
          %p533 = pneg %p352
        $region66: #{tpu_custom_call.1} parent=11 // pred_check_branch
          %535 = sbr.rel (%p533) target = $region68
        $region67: #{tpu_custom_call.1} parent=11 // pred_region
          _
        $region68: #{tpu_custom_call.1} parent=11 // pred_fallthru
          _
        // Predicated region
        $region69: #{tpu_custom_call.1} parent=11 // pred_check
          %p536 = pneg %p373
        $region70: #{tpu_custom_call.1} parent=11 // pred_check_branch
          %538 = sbr.rel (%p536) target = $region72
        $region71: #{tpu_custom_call.1} parent=11 // pred_region
          _
        $region72: #{tpu_custom_call.1} parent=11 // pred_fallthru
          _
      $region12: #{tpu_custom_call.1} parent=5 // pred_fallthru
        _
      %p539 = scmp.lt.s32.totalorder %s32, 4
      // Predicated region
      $region73: #{tpu_custom_call.1} parent=5 // pred_check
        %p540 = pneg %p539
      $region74: #{tpu_custom_call.1} parent=5 // pred_check_branch
        %542 = sbr.rel (%p540) target = $region76
      $region75: #{tpu_custom_call.1} parent=5 // pred_region
        // Predicated region
        $region77: #{tpu_custom_call.1} parent=75 // pred_check
          %p543 = pneg %p73
        $region78: #{tpu_custom_call.1} parent=75 // pred_check_branch
          %545 = sbr.rel (%p543) target = $region80
        $region79: #{tpu_custom_call.1} parent=75 // pred_region
          %s546 = sand.u32 %s32, 1
          %s547 = scalar_lea.sflag [#allocation7], %s546
          %s548 = sand.u32 %s63, 1
          %s549 = smul.addr %s548, 8
          %s550 = scalar_lea.vmem [#allocation6], %s549
          %s552 = ssub.s32 128, 128
          %553 = vsyncadd %s547, %s552
          %s554 = smul.addr %s32, 2
          %s555 = smul.addr %s554, 64
          %s556 = scalar_lea.hbm %s1, %s555
          %s557 = sshll.u32 %s550, 4
          %s558 = int_to_ptr.vmem [resolvable:$true] %s557
          %563 = dma.hbm_to_vmem [thread:$0]  %s556, 128, %s558, %s547, 64, 64, 4
        $region80: #{tpu_custom_call.1} parent=75 // pred_fallthru
          _
      $region76: #{tpu_custom_call.1} parent=5 // pred_fallthru
        _
      %p564 = scmp.le.s32.totalorder 1, %s32
      %p565 = scmp.lt.s32.totalorder %s32, 5
      %p566 = pnand %p564, %p565
      %p567 = pneg %p566
      // Predicated region
      $region81: #{tpu_custom_call.1} parent=5 // pred_check
        _
      $region82: #{tpu_custom_call.1} parent=5 // pred_check_branch
        %569 = sbr.rel (%p566) target = $region84
      $region83: #{tpu_custom_call.1} parent=5 // pred_region
        %s570 = ssub.s32 %s32, 1
        // Predicated region
        $region85: #{tpu_custom_call.1} parent=83 // pred_check
          %p571 = pneg %p53
        $region86: #{tpu_custom_call.1} parent=83 // pred_check_branch
          %573 = sbr.rel (%p571) target = $region88
        $region87: #{tpu_custom_call.1} parent=83 // pred_region
          %574 = dma.done [#allocation4], 128
        $region88: #{tpu_custom_call.1} parent=83 // pred_fallthru
          _
        %s575 = sand.u32 %s37, 1
        %s576 = scalar_lea.sflag [#allocation7], %s575
        %s577 = sand.u32 %s66, 1
        %s578 = smul.addr %s577, 8
        %s579 = scalar_lea.vmem [#allocation6], %s578
        // Predicated region
        $region89: #{tpu_custom_call.1} parent=83 // pred_check
          %p580 = pneg %p79
        $region90: #{tpu_custom_call.1} parent=83 // pred_check_branch
          %582 = sbr.rel (%p580) target = $region92
        $region91: #{tpu_custom_call.1} parent=83 // pred_region
          %583 = dma.done %s576, 128
        $region92: #{tpu_custom_call.1} parent=83 // pred_fallthru
          _
        // Predicated region
        $region93: #{tpu_custom_call.1} parent=83 // pred_check
          %p584 = pneg %p100
        $region94: #{tpu_custom_call.1} parent=83 // pred_check_branch
          %586 = sbr.rel (%p584) target = $region96
        $region95: #{tpu_custom_call.1} parent=83 // pred_region
          %587 = dma.done [#allocation7], 256
        $region96: #{tpu_custom_call.1} parent=83 // pred_fallthru
          _
        // Predicated region
        $region97: #{tpu_custom_call.1} parent=83 // pred_check
          %p588 = pneg %p121
        $region98: #{tpu_custom_call.1} parent=83 // pred_check_branch
          %590 = sbr.rel (%p588) target = $region100
        $region99: #{tpu_custom_call.1} parent=83 // pred_region
          %591 = dma.done [#allocation10], 256
        $region100: #{tpu_custom_call.1} parent=83 // pred_fallthru
          _
        // Predicated region
        $region101: #{tpu_custom_call.1} parent=83 // pred_check
          %p592 = pneg %p142
        $region102: #{tpu_custom_call.1} parent=83 // pred_check_branch
          %594 = sbr.rel (%p592) target = $region104
        $region103: #{tpu_custom_call.1} parent=83 // pred_region
          %595 = dma.done [#allocation10], 256
        $region104: #{tpu_custom_call.1} parent=83 // pred_fallthru
          _
        // Predicated region
        $region105: #{tpu_custom_call.1} parent=83 // pred_check
          %p596 = pneg %p163
        $region106: #{tpu_custom_call.1} parent=83 // pred_check_branch
          %598 = sbr.rel (%p596) target = $region108
        $region107: #{tpu_custom_call.1} parent=83 // pred_region
          %599 = dma.done [#allocation13], 256
        $region108: #{tpu_custom_call.1} parent=83 // pred_fallthru
          _
        // Predicated region
        $region109: #{tpu_custom_call.1} parent=83 // pred_check
          %p600 = pneg %p184
        $region110: #{tpu_custom_call.1} parent=83 // pred_check_branch
          %602 = sbr.rel (%p600) target = $region112
        $region111: #{tpu_custom_call.1} parent=83 // pred_region
          %603 = dma.done [#allocation13], 256
        $region112: #{tpu_custom_call.1} parent=83 // pred_fallthru
          _
        // Predicated region
        $region113: #{tpu_custom_call.1} parent=83 // pred_check
          %p604 = pneg %p205
        $region114: #{tpu_custom_call.1} parent=83 // pred_check_branch
          %606 = sbr.rel (%p604) target = $region116
        $region115: #{tpu_custom_call.1} parent=83 // pred_region
          %607 = dma.done [#allocation16], 256
        $region116: #{tpu_custom_call.1} parent=83 // pred_fallthru
          _
        // Predicated region
        $region117: #{tpu_custom_call.1} parent=83 // pred_check
          %p608 = pneg %p226
        $region118: #{tpu_custom_call.1} parent=83 // pred_check_branch
          %610 = sbr.rel (%p608) target = $region120
        $region119: #{tpu_custom_call.1} parent=83 // pred_region
          %611 = dma.done [#allocation16], 256
        $region120: #{tpu_custom_call.1} parent=83 // pred_fallthru
          _
        %p612 = pneg %p53
        %p613 = pneg %p50
        %s614 = sand.u32 %s37, 1
        %s615 = scalar_lea.sflag [#allocation7], %s614
        %s616 = sand.u32 %s66, 1
        %s617 = smul.addr %s616, 8
        %s618 = scalar_lea.vmem [#allocation6], %s617
        %p619 = pneg %p79
        %p620 = pneg %p76
        %p621 = pneg %p100
        %p622 = pneg %p97
        %p623 = pneg %p121
        %p624 = pneg %p118
        %p625 = pneg %p142
        %p626 = pneg %p139
        %p627 = pneg %p163
        %p628 = pneg %p160
        %p629 = pneg %p184
        %p630 = pneg %p181
        %p631 = pneg %p205
        %p632 = pneg %p202
        %p633 = pneg %p226
        %p634 = pneg %p223
        %p635 = pneg %p247
        %p636 = pneg %p244
        %p637 = pneg %p268
        %p638 = pneg %p265
        %p639 = pneg %p289
        %p640 = pneg %p286
        %p641 = pneg %p310
        %p642 = pneg %p307
        %p643 = pneg %p331
        %p644 = pneg %p328
        %p645 = pneg %p352
        %p646 = pneg %p349
        %p647 = pneg %p373
        %p648 = pneg %p370
        %p649 = pneg %p399
        %p650 = pneg %p396
        %s651 = sand.u32 %s386, 1
        %s652 = scalar_lea.sflag [#allocation5], %s651
        %s653 = sand.u32 %s386, 1
        %s654 = smul.addr %s653, 16
        %s655 = scalar_lea.vmem [#allocation18], %s654
        %p657 = scmp.eq.s32.totalorder %s37, 0
        // Predicated region
        $region121: #{tpu_custom_call.1} parent=83 // pred_check
          %p658 = pneg %p657
        $region122: #{tpu_custom_call.1} parent=83 // pred_check_branch
          %660 = sbr.rel (%p658) target = $region124
        $region123: #{tpu_custom_call.1} parent=83 // pred_region
          %vm661 = vcmask 261120
          %662 = vst.msk [vmem:[#allocation2] sm:$0xff] %vm661, 0.0
          %663 = vst.msk [vmem:[#allocation2 + $0x8] sm:$0xff] %vm661, 0.0
        $region124: #{tpu_custom_call.1} parent=83 // pred_fallthru
          _
        %v664 = vld [vmem:[#allocation3] sm:$0xf]
        %v665 = vld [vmem:[#allocation3 + $0x4] sm:$0xf]
        %v666 = vld [vmem:[%s579] sm:$0xf]
        %v667 = vld [vmem:[%s579 + $0x4] sm:$0xf]
        %v668 = vld [vmem:[#allocation2] sm:$0xff]
        %v669 = vld [vmem:[#allocation2 + $0x8] sm:$0xff]
        %v670 = vld [vmem:[#allocation9] sm:$0xf]
        %v671 = vld [vmem:[#allocation9 + $0x4] sm:$0xf]
        %v672 = vld [vmem:[#allocation9 + $0x8] sm:$0xf]
        %v673 = vld [vmem:[#allocation9 + $0xc] sm:$0xf]
        %v676 = vunpack.c.l.b16 %v666
        %v677 = vunpack.c.l.b16 %v667
        %v678 = vpack.c.b16 %v677, %v676
        %v683 = vunpack.c.l.b16 %v670
        %v684 = vunpack.c.l.b16 %v671
        %v685 = vunpack.c.l.b16 %v672
        %v686 = vunpack.c.l.b16 %v673
        %v687 = vpack.c.b16 %v684, %v683
        %v688 = vpack.c.b16 %v686, %v685
        %vm691 = vcmask 261120
        %v693 = vsel %vm691, %v678, 0
        %695 = vmatprep.subr.bf16.mxu0 0
        %696 = vmatpush1.bf16.msra.mxu0 0
        %697 = vmatprep.subr.bf16.mxu0 0
        %698 = vmatpush1.bf16.msra.mxu0 0
        %699 = vmatprep.subr.bf16.mxu0 0
        %700 = vmatpush1.bf16.msra.mxu0 0
        %701 = vmatprep.subr.bf16.mxu0 0
        %702 = vmatpush1.bf16.msra.mxu0 0
        %703 = vmatprep.subr.bf16.mxu0 0
        %704 = vmatpush1.bf16.msra.mxu0 0
        %705 = vmatprep.subr.bf16.mxu0 0
        %706 = vmatpush1.bf16.msra.mxu0 0
        %707 = vmatprep.subr.bf16.mxu0 0
        %708 = vmatpush1.bf16.msra.mxu0 %v688
        %709 = vmatprep.subr.bf16.mxu0 0
        %710 = vmatpush1.bf16.msra.mxu0 %v687
        %711 = vmatprep.subr.bf16.mxu0 0
        %712 = vmatpush2.bf16.msra.mxu0 0
        %713 = vmatprep.subr.bf16.mxu0 0
        %714 = vmatpush2.bf16.msra.mxu0 0
        %715 = vmatprep.subr.bf16.mxu0 0
        %716 = vmatpush2.bf16.msra.mxu0 0
        %717 = vmatprep.subr.bf16.mxu0 0
        %718 = vmatpush2.bf16.msra.mxu0 0
        %719 = vmatprep.subr.bf16.mxu0 0
        %720 = vmatpush2.bf16.msra.mxu0 0
        %721 = vmatprep.subr.bf16.mxu0 0
        %722 = vmatpush2.bf16.msra.mxu0 0
        %723 = vmatprep.subr.bf16.mxu0 0
        %724 = vmatpush2.bf16.msra.mxu0 0
        %725 = vmatprep.subr.bf16.mxu0 0
        %726 = vmatpush2.bf16.msra.mxu0 0
        %727 = vmatprep.mubr.bf16.mxu0 0
        %728 = vmatmul.mubr.bf16.gmra.mxu0 %v693
        %v729 = vpop.f32.mrf.mxu0
        %v730 = vadd.f32 0.0, %v729
        %v731 = vpop.f32.mrf.mxu0
        %v732 = vpop.f32.mrf.mxu0
        %v733 = vadd.f32 0.0, %v732
        %v734 = vpop.f32.mrf.mxu0
        %735 = vdwg.mxu0
        %v736 = vld [vmem:[#allocation15] sm:$0xf]
        %v737 = vld [vmem:[#allocation15 + $0x4] sm:$0xf]
        %v738 = vld [vmem:[#allocation15 + $0x8] sm:$0xf]
        %v739 = vld [vmem:[#allocation15 + $0xc] sm:$0xf]
        %v744 = vunpack.c.l.b16 %v736
        %v745 = vunpack.c.l.b16 %v737
        %v746 = vunpack.c.l.b16 %v738
        %v747 = vunpack.c.l.b16 %v739
        %v748 = vpack.c.b16 %v745, %v744
        %v749 = vpack.c.b16 %v747, %v746
        %752 = vmatprep.subr.bf16.mxu0 0
        %753 = vmatpush1.bf16.msra.mxu0 0
        %754 = vmatprep.subr.bf16.mxu0 0
        %755 = vmatpush1.bf16.msra.mxu0 0
        %756 = vmatprep.subr.bf16.mxu0 0
        %757 = vmatpush1.bf16.msra.mxu0 0
        %758 = vmatprep.subr.bf16.mxu0 0
        %759 = vmatpush1.bf16.msra.mxu0 0
        %760 = vmatprep.subr.bf16.mxu0 0
        %761 = vmatpush1.bf16.msra.mxu0 0
        %762 = vmatprep.subr.bf16.mxu0 0
        %763 = vmatpush1.bf16.msra.mxu0 0
        %764 = vmatprep.subr.bf16.mxu0 0
        %765 = vmatpush1.bf16.msra.mxu0 %v749
        %766 = vmatprep.subr.bf16.mxu0 0
        %767 = vmatpush1.bf16.msra.mxu0 %v748
        %768 = vmatprep.subr.bf16.mxu0 0
        %769 = vmatpush2.bf16.msra.mxu0 0
        %770 = vmatprep.subr.bf16.mxu0 0
        %771 = vmatpush2.bf16.msra.mxu0 0
        %772 = vmatprep.subr.bf16.mxu0 0
        %773 = vmatpush2.bf16.msra.mxu0 0
        %774 = vmatprep.subr.bf16.mxu0 0
        %775 = vmatpush2.bf16.msra.mxu0 0
        %776 = vmatprep.subr.bf16.mxu0 0
        %777 = vmatpush2.bf16.msra.mxu0 0
        %778 = vmatprep.subr.bf16.mxu0 0
        %779 = vmatpush2.bf16.msra.mxu0 0
        %780 = vmatprep.subr.bf16.mxu0 0
        %781 = vmatpush2.bf16.msra.mxu0 0
        %782 = vmatprep.subr.bf16.mxu0 0
        %783 = vmatpush2.bf16.msra.mxu0 0
        %784 = vmatprep.mubr.bf16.mxu0 0
        %785 = vmatmul.mubr.bf16.gmra.mxu0 %v693
        %v786 = vpop.f32.mrf.mxu0
        %v787 = vadd.f32 0.0, %v786
        %v788 = vpop.f32.mrf.mxu0
        %v789 = vpop.f32.mrf.mxu0
        %v790 = vadd.f32 0.0, %v789
        %v791 = vpop.f32.mrf.mxu0
        %792 = vdwg.mxu0
        %v793 = vld [vmem:[#allocation8] sm:$0xf]
        %v794 = vld [vmem:[#allocation8 + $0x4] sm:$0xf]
        %v795 = vld [vmem:[#allocation8 + $0x8] sm:$0xf]
        %v796 = vld [vmem:[#allocation8 + $0xc] sm:$0xf]
        %v797 = vpack.c.bf16 %v669, %v668
        %v802 = vunpack.c.l.b16 %v793
        %v803 = vunpack.c.l.b16 %v794
        %v804 = vunpack.c.l.b16 %v795
        %v805 = vunpack.c.l.b16 %v796
        %v806 = vpack.c.b16 %v803, %v802
        %v807 = vpack.c.b16 %v805, %v804
        %v811 = vsel %vm691, %v797, 0
        %813 = vmatprep.subr.bf16.mxu0 0
        %814 = vmatpush1.bf16.msra.mxu0 0
        %815 = vmatprep.subr.bf16.mxu0 0
        %816 = vmatpush1.bf16.msra.mxu0 0
        %817 = vmatprep.subr.bf16.mxu0 0
        %818 = vmatpush1.bf16.msra.mxu0 0
        %819 = vmatprep.subr.bf16.mxu0 0
        %820 = vmatpush1.bf16.msra.mxu0 0
        %821 = vmatprep.subr.bf16.mxu0 0
        %822 = vmatpush1.bf16.msra.mxu0 0
        %823 = vmatprep.subr.bf16.mxu0 0
        %824 = vmatpush1.bf16.msra.mxu0 0
        %825 = vmatprep.subr.bf16.mxu0 0
        %826 = vmatpush1.bf16.msra.mxu0 %v807
        %827 = vmatprep.subr.bf16.mxu0 0
        %828 = vmatpush1.bf16.msra.mxu0 %v806
        %829 = vmatprep.subr.bf16.mxu0 0
        %830 = vmatpush2.bf16.msra.mxu0 0
        %831 = vmatprep.subr.bf16.mxu0 0
        %832 = vmatpush2.bf16.msra.mxu0 0
        %833 = vmatprep.subr.bf16.mxu0 0
        %834 = vmatpush2.bf16.msra.mxu0 0
        %835 = vmatprep.subr.bf16.mxu0 0
        %836 = vmatpush2.bf16.msra.mxu0 0
        %837 = vmatprep.subr.bf16.mxu0 0
        %838 = vmatpush2.bf16.msra.mxu0 0
        %839 = vmatprep.subr.bf16.mxu0 0
        %840 = vmatpush2.bf16.msra.mxu0 0
        %841 = vmatprep.subr.bf16.mxu0 0
        %842 = vmatpush2.bf16.msra.mxu0 0
        %843 = vmatprep.subr.bf16.mxu0 0
        %844 = vmatpush2.bf16.msra.mxu0 0
        %845 = vmatprep.mubr.bf16.mxu0 0
        %846 = vmatmul.mubr.bf16.gmra.mxu0 %v811
        %v847 = vpop.f32.mrf.mxu0
        %v848 = vadd.f32 %v730, %v847
        %v849 = vpop.f32.mrf.mxu0
        %v850 = vpop.f32.mrf.mxu0
        %v851 = vadd.f32 %v733, %v850
        %v852 = vpop.f32.mrf.mxu0
        %853 = vdwg.mxu0
        %v854 = vpack.c.bf16 %v851, %v848
        %v855 = vld [vmem:[%s10] sm:$0x1]
        %v857 = vlaneseq
        %v858 = vshrl.u32 %v857, 7
        %v859 = vsub.s32 0, %v858
        %v860 = vrot.slane %v855, %v859
        %v864 = vunpack.c.l.b16 %v664
        %v865 = vunpack.c.l.b16 %v665
        %v866 = vpack.c.b16 %v865, %v864
        %vm867 = vcmask 130048
        %v869 = vsel %vm867, %v866, 0
        %871 = vmatprep.subr.bf16.mxu0 0
        %872 = vmatpush1.bf16.msra.mxu0 0
        %873 = vmatprep.subr.bf16.mxu0 0
        %874 = vmatpush1.bf16.msra.mxu0 0
        %875 = vmatprep.subr.bf16.mxu0 0
        %876 = vmatpush1.bf16.msra.mxu0 0
        %877 = vmatprep.subr.bf16.mxu0 0
        %878 = vmatpush1.bf16.msra.mxu0 0
        %879 = vmatprep.subr.bf16.mxu0 0
        %880 = vmatpush1.bf16.msra.mxu0 0
        %881 = vmatprep.subr.bf16.mxu0 0
        %882 = vmatpush1.bf16.msra.mxu0 0
        %883 = vmatprep.subr.bf16.mxu0 0
        %884 = vmatpush1.bf16.msra.mxu0 0
        %885 = vmatprep.subr.bf16.mxu0 0
        %886 = vmatpush1.bf16.msra.mxu0 %v854
        %887 = vmatprep.subr.bf16.mxu0 0
        %888 = vmatpush2.bf16.msra.mxu0 0
        %889 = vmatprep.subr.bf16.mxu0 0
        %890 = vmatpush2.bf16.msra.mxu0 0
        %891 = vmatprep.subr.bf16.mxu0 0
        %892 = vmatpush2.bf16.msra.mxu0 0
        %893 = vmatprep.subr.bf16.mxu0 0
        %894 = vmatpush2.bf16.msra.mxu0 0
        %895 = vmatprep.subr.bf16.mxu0 0
        %896 = vmatpush2.bf16.msra.mxu0 0
        %897 = vmatprep.subr.bf16.mxu0 0
        %898 = vmatpush2.bf16.msra.mxu0 0
        %899 = vmatprep.subr.bf16.mxu0 0
        %900 = vmatpush2.bf16.msra.mxu0 0
        %901 = vmatprep.subr.bf16.mxu0 0
        %902 = vmatpush2.bf16.msra.mxu0 0
        %903 = vmatprep.mubr.bf16.mxu0 0
        %904 = vmatmul.mubr.bf16.gmra.mxu0 %v869
        %v905 = vpop.f32.mrf.mxu0
        %v906 = vadd.f32 %v860, %v905
        %v907 = vpop.f32.mrf.mxu0
        %v908 = vpop.f32.mrf.mxu0
        %v909 = vadd.f32 %v860, %v908
        %v910 = vpop.f32.mrf.mxu0
        %911 = vdwg.mxu0
        %v912 = vmax.f32 %v906, 0.0
        %v913 = vmax.f32 %v909, 0.0
        %v914 = vld [vmem:[#allocation11] sm:$0xf]
        %v915 = vld [vmem:[#allocation11 + $0x4] sm:$0xf]
        %v916 = vld [vmem:[#allocation11 + $0x8] sm:$0xf]
        %v917 = vld [vmem:[#allocation11 + $0xc] sm:$0xf]
        %v918 = vpack.c.bf16 %v913, %v912
        %v923 = vunpack.c.l.b16 %v914
        %v924 = vunpack.c.l.b16 %v915
        %v925 = vunpack.c.l.b16 %v916
        %v926 = vunpack.c.l.b16 %v917
        %v927 = vpack.c.b16 %v924, %v923
        %v928 = vpack.c.b16 %v926, %v925
        %v932 = vsel %vm691, %v918, 0
        %934 = vmatprep.subr.bf16.mxu0 0
        %935 = vmatpush1.bf16.msra.mxu0 0
        %936 = vmatprep.subr.bf16.mxu0 0
        %937 = vmatpush1.bf16.msra.mxu0 0
        %938 = vmatprep.subr.bf16.mxu0 0
        %939 = vmatpush1.bf16.msra.mxu0 0
        %940 = vmatprep.subr.bf16.mxu0 0
        %941 = vmatpush1.bf16.msra.mxu0 0
        %942 = vmatprep.subr.bf16.mxu0 0
        %943 = vmatpush1.bf16.msra.mxu0 0
        %944 = vmatprep.subr.bf16.mxu0 0
        %945 = vmatpush1.bf16.msra.mxu0 0
        %946 = vmatprep.subr.bf16.mxu0 0
        %947 = vmatpush1.bf16.msra.mxu0 %v928
        %948 = vmatprep.subr.bf16.mxu0 0
        %949 = vmatpush1.bf16.msra.mxu0 %v927
        %950 = vmatprep.subr.bf16.mxu0 0
        %951 = vmatpush2.bf16.msra.mxu0 0
        %952 = vmatprep.subr.bf16.mxu0 0
        %953 = vmatpush2.bf16.msra.mxu0 0
        %954 = vmatprep.subr.bf16.mxu0 0
        %955 = vmatpush2.bf16.msra.mxu0 0
        %956 = vmatprep.subr.bf16.mxu0 0
        %957 = vmatpush2.bf16.msra.mxu0 0
        %958 = vmatprep.subr.bf16.mxu0 0
        %959 = vmatpush2.bf16.msra.mxu0 0
        %960 = vmatprep.subr.bf16.mxu0 0
        %961 = vmatpush2.bf16.msra.mxu0 0
        %962 = vmatprep.subr.bf16.mxu0 0
        %963 = vmatpush2.bf16.msra.mxu0 0
        %964 = vmatprep.subr.bf16.mxu0 0
        %965 = vmatpush2.bf16.msra.mxu0 0
        %966 = vmatprep.mubr.bf16.mxu0 0
        %967 = vmatmul.mubr.bf16.gmra.mxu0 %v932
        %v968 = vpop.f32.mrf.mxu0
        %v969 = vadd.f32 0.0, %v968
        %v970 = vpop.f32.mrf.mxu0
        %v971 = vpop.f32.mrf.mxu0
        %v972 = vadd.f32 0.0, %v971
        %v973 = vpop.f32.mrf.mxu0
        %974 = vdwg.mxu0
        %v975 = vpack.c.bf16 %v972, %v969
        %v976 = vld [vmem:[%s11] sm:$0x1]
        %v978 = vlaneseq
        %v979 = vshrl.u32 %v978, 7
        %v980 = vsub.s32 0, %v979
        %v981 = vrot.slane %v976, %v980
        %983 = vmatprep.subr.bf16.mxu0 0
        %984 = vmatpush1.bf16.msra.mxu0 0
        %985 = vmatprep.subr.bf16.mxu0 0
        %986 = vmatpush1.bf16.msra.mxu0 0
        %987 = vmatprep.subr.bf16.mxu0 0
        %988 = vmatpush1.bf16.msra.mxu0 0
        %989 = vmatprep.subr.bf16.mxu0 0
        %990 = vmatpush1.bf16.msra.mxu0 0
        %991 = vmatprep.subr.bf16.mxu0 0
        %992 = vmatpush1.bf16.msra.mxu0 0
        %993 = vmatprep.subr.bf16.mxu0 0
        %994 = vmatpush1.bf16.msra.mxu0 0
        %995 = vmatprep.subr.bf16.mxu0 0
        %996 = vmatpush1.bf16.msra.mxu0 0
        %997 = vmatprep.subr.bf16.mxu0 0
        %998 = vmatpush1.bf16.msra.mxu0 %v975
        %999 = vmatprep.subr.bf16.mxu0 0
        %1000 = vmatpush2.bf16.msra.mxu0 0
        %1001 = vmatprep.subr.bf16.mxu0 0
        %1002 = vmatpush2.bf16.msra.mxu0 0
        %1003 = vmatprep.subr.bf16.mxu0 0
        %1004 = vmatpush2.bf16.msra.mxu0 0
        %1005 = vmatprep.subr.bf16.mxu0 0
        %1006 = vmatpush2.bf16.msra.mxu0 0
        %1007 = vmatprep.subr.bf16.mxu0 0
        %1008 = vmatpush2.bf16.msra.mxu0 0
        %1009 = vmatprep.subr.bf16.mxu0 0
        %1010 = vmatpush2.bf16.msra.mxu0 0
        %1011 = vmatprep.subr.bf16.mxu0 0
        %1012 = vmatpush2.bf16.msra.mxu0 0
        %1013 = vmatprep.subr.bf16.mxu0 0
        %1014 = vmatpush2.bf16.msra.mxu0 0
        %1015 = vmatprep.mubr.bf16.mxu0 0
        %1016 = vmatmul.mubr.bf16.gmra.mxu0 %v869
        %v1017 = vpop.f32.mrf.mxu0
        %v1018 = vadd.f32 %v981, %v1017
        %v1019 = vpop.f32.mrf.mxu0
        %v1020 = vpop.f32.mrf.mxu0
        %v1021 = vadd.f32 %v981, %v1020
        %v1022 = vpop.f32.mrf.mxu0
        %1023 = vdwg.mxu0
        %v1024 = vmax.f32 %v1018, 0.0
        %v1025 = vmax.f32 %v1021, 0.0
        %v1026 = vld [vmem:[#allocation12] sm:$0xf]
        %v1027 = vld [vmem:[#allocation12 + $0x4] sm:$0xf]
        %v1028 = vld [vmem:[#allocation12 + $0x8] sm:$0xf]
        %v1029 = vld [vmem:[#allocation12 + $0xc] sm:$0xf]
        %v1030 = vpack.c.bf16 %v1025, %v1024
        %v1035 = vunpack.c.l.b16 %v1026
        %v1036 = vunpack.c.l.b16 %v1027
        %v1037 = vunpack.c.l.b16 %v1028
        %v1038 = vunpack.c.l.b16 %v1029
        %v1039 = vpack.c.b16 %v1036, %v1035
        %v1040 = vpack.c.b16 %v1038, %v1037
        %v1044 = vsel %vm691, %v1030, 0
        %1046 = vmatprep.subr.bf16.mxu0 0
        %1047 = vmatpush1.bf16.msra.mxu0 0
        %1048 = vmatprep.subr.bf16.mxu0 0
        %1049 = vmatpush1.bf16.msra.mxu0 0
        %1050 = vmatprep.subr.bf16.mxu0 0
        %1051 = vmatpush1.bf16.msra.mxu0 0
        %1052 = vmatprep.subr.bf16.mxu0 0
        %1053 = vmatpush1.bf16.msra.mxu0 0
        %1054 = vmatprep.subr.bf16.mxu0 0
        %1055 = vmatpush1.bf16.msra.mxu0 0
        %1056 = vmatprep.subr.bf16.mxu0 0
        %1057 = vmatpush1.bf16.msra.mxu0 0
        %1058 = vmatprep.subr.bf16.mxu0 0
        %1059 = vmatpush1.bf16.msra.mxu0 %v1040
        %1060 = vmatprep.subr.bf16.mxu0 0
        %1061 = vmatpush1.bf16.msra.mxu0 %v1039
        %1062 = vmatprep.subr.bf16.mxu0 0
        %1063 = vmatpush2.bf16.msra.mxu0 0
        %1064 = vmatprep.subr.bf16.mxu0 0
        %1065 = vmatpush2.bf16.msra.mxu0 0
        %1066 = vmatprep.subr.bf16.mxu0 0
        %1067 = vmatpush2.bf16.msra.mxu0 0
        %1068 = vmatprep.subr.bf16.mxu0 0
        %1069 = vmatpush2.bf16.msra.mxu0 0
        %1070 = vmatprep.subr.bf16.mxu0 0
        %1071 = vmatpush2.bf16.msra.mxu0 0
        %1072 = vmatprep.subr.bf16.mxu0 0
        %1073 = vmatpush2.bf16.msra.mxu0 0
        %1074 = vmatprep.subr.bf16.mxu0 0
        %1075 = vmatpush2.bf16.msra.mxu0 0
        %1076 = vmatprep.subr.bf16.mxu0 0
        %1077 = vmatpush2.bf16.msra.mxu0 0
        %1078 = vmatprep.mubr.bf16.mxu0 0
        %1079 = vmatmul.mubr.bf16.gmra.mxu0 %v1044
        %v1080 = vpop.f32.mrf.mxu0
        %v1081 = vadd.f32 0.0, %v1080
        %v1082 = vpop.f32.mrf.mxu0
        %v1083 = vpop.f32.mrf.mxu0
        %v1084 = vadd.f32 0.0, %v1083
        %v1085 = vpop.f32.mrf.mxu0
        %1086 = vdwg.mxu0
        %v1087 = vpack.c.bf16 %v1084, %v1081
        %v1088 = vld [vmem:[%s12] sm:$0x1]
        %v1090 = vlaneseq
        %v1091 = vshrl.u32 %v1090, 7
        %v1092 = vsub.s32 0, %v1091
        %v1093 = vrot.slane %v1088, %v1092
        %1095 = vmatprep.subr.bf16.mxu0 0
        %1096 = vmatpush1.bf16.msra.mxu0 0
        %1097 = vmatprep.subr.bf16.mxu0 0
        %1098 = vmatpush1.bf16.msra.mxu0 0
        %1099 = vmatprep.subr.bf16.mxu0 0
        %1100 = vmatpush1.bf16.msra.mxu0 0
        %1101 = vmatprep.subr.bf16.mxu0 0
        %1102 = vmatpush1.bf16.msra.mxu0 0
        %1103 = vmatprep.subr.bf16.mxu0 0
        %1104 = vmatpush1.bf16.msra.mxu0 0
        %1105 = vmatprep.subr.bf16.mxu0 0
        %1106 = vmatpush1.bf16.msra.mxu0 0
        %1107 = vmatprep.subr.bf16.mxu0 0
        %1108 = vmatpush1.bf16.msra.mxu0 0
        %1109 = vmatprep.subr.bf16.mxu0 0
        %1110 = vmatpush1.bf16.msra.mxu0 %v1087
        %1111 = vmatprep.subr.bf16.mxu0 0
        %1112 = vmatpush2.bf16.msra.mxu0 0
        %1113 = vmatprep.subr.bf16.mxu0 0
        %1114 = vmatpush2.bf16.msra.mxu0 0
        %1115 = vmatprep.subr.bf16.mxu0 0
        %1116 = vmatpush2.bf16.msra.mxu0 0
        %1117 = vmatprep.subr.bf16.mxu0 0
        %1118 = vmatpush2.bf16.msra.mxu0 0
        %1119 = vmatprep.subr.bf16.mxu0 0
        %1120 = vmatpush2.bf16.msra.mxu0 0
        %1121 = vmatprep.subr.bf16.mxu0 0
        %1122 = vmatpush2.bf16.msra.mxu0 0
        %1123 = vmatprep.subr.bf16.mxu0 0
        %1124 = vmatpush2.bf16.msra.mxu0 0
        %1125 = vmatprep.subr.bf16.mxu0 0
        %1126 = vmatpush2.bf16.msra.mxu0 0
        %1127 = vmatprep.mubr.bf16.mxu0 0
        %1128 = vmatmul.mubr.bf16.gmra.mxu0 %v869
        %v1129 = vpop.f32.mrf.mxu0
        %v1130 = vadd.f32 %v1093, %v1129
        %v1131 = vpop.f32.mrf.mxu0
        %v1132 = vpop.f32.mrf.mxu0
        %v1133 = vadd.f32 %v1093, %v1132
        %v1134 = vpop.f32.mrf.mxu0
        %1135 = vdwg.mxu0
        %v1136 = vxor.u32 %v1130, 2147483648
        %v1137 = vxor.u32 %v1133, 2147483648
        %v1138 = vmul.f32 %v1136, 1.442695
        %v1139 = vpow.pop %v1138
        %v1140 = vmul.f32 %v1137, 1.442695
        %v1141 = vpow.pop %v1140
        %v1142 = vadd.f32 %v1139, 1.0
        %v1143 = vadd.f32 %v1141, 1.0
        %v1144 = vrcp.pop %v1142
        %v1145 = vmul.f32 1.0, %v1144
        %v1146 = vrcp.pop %v1143
        %v1147 = vmul.f32 1.0, %v1146
        %v1148 = vmul.f32 %v668, %v1145
        %v1149 = vmul.f32 %v669, %v1147
        %v1150 = vld [vmem:[#allocation14] sm:$0xf]
        %v1151 = vld [vmem:[#allocation14 + $0x4] sm:$0xf]
        %v1152 = vld [vmem:[#allocation14 + $0x8] sm:$0xf]
        %v1153 = vld [vmem:[#allocation14 + $0xc] sm:$0xf]
        %v1154 = vpack.c.bf16 %v1149, %v1148
        %v1159 = vunpack.c.l.b16 %v1150
        %v1160 = vunpack.c.l.b16 %v1151
        %v1161 = vunpack.c.l.b16 %v1152
        %v1162 = vunpack.c.l.b16 %v1153
        %v1163 = vpack.c.b16 %v1160, %v1159
        %v1164 = vpack.c.b16 %v1162, %v1161
        %v1168 = vsel %vm691, %v1154, 0
        %1170 = vmatprep.subr.bf16.mxu0 0
        %1171 = vmatpush1.bf16.msra.mxu0 0
        %1172 = vmatprep.subr.bf16.mxu0 0
        %1173 = vmatpush1.bf16.msra.mxu0 0
        %1174 = vmatprep.subr.bf16.mxu0 0
        %1175 = vmatpush1.bf16.msra.mxu0 0
        %1176 = vmatprep.subr.bf16.mxu0 0
        %1177 = vmatpush1.bf16.msra.mxu0 0
        %1178 = vmatprep.subr.bf16.mxu0 0
        %1179 = vmatpush1.bf16.msra.mxu0 0
        %1180 = vmatprep.subr.bf16.mxu0 0
        %1181 = vmatpush1.bf16.msra.mxu0 0
        %1182 = vmatprep.subr.bf16.mxu0 0
        %1183 = vmatpush1.bf16.msra.mxu0 %v1164
        %1184 = vmatprep.subr.bf16.mxu0 0
        %1185 = vmatpush1.bf16.msra.mxu0 %v1163
        %1186 = vmatprep.subr.bf16.mxu0 0
        %1187 = vmatpush2.bf16.msra.mxu0 0
        %1188 = vmatprep.subr.bf16.mxu0 0
        %1189 = vmatpush2.bf16.msra.mxu0 0
        %1190 = vmatprep.subr.bf16.mxu0 0
        %1191 = vmatpush2.bf16.msra.mxu0 0
        %1192 = vmatprep.subr.bf16.mxu0 0
        %1193 = vmatpush2.bf16.msra.mxu0 0
        %1194 = vmatprep.subr.bf16.mxu0 0
        %1195 = vmatpush2.bf16.msra.mxu0 0
        %1196 = vmatprep.subr.bf16.mxu0 0
        %1197 = vmatpush2.bf16.msra.mxu0 0
        %1198 = vmatprep.subr.bf16.mxu0 0
        %1199 = vmatpush2.bf16.msra.mxu0 0
        %1200 = vmatprep.subr.bf16.mxu0 0
        %1201 = vmatpush2.bf16.msra.mxu0 0
        %1202 = vmatprep.mubr.bf16.mxu0 0
        %1203 = vmatmul.mubr.bf16.gmra.mxu0 %v1168
        %v1204 = vpop.f32.mrf.mxu0
        %v1205 = vadd.f32 %v787, %v1204
        %v1206 = vpop.f32.mrf.mxu0
        %v1207 = vpop.f32.mrf.mxu0
        %v1208 = vadd.f32 %v790, %v1207
        %v1209 = vpop.f32.mrf.mxu0
        %1210 = vdwg.mxu0
        %v1211 = vpack.c.bf16 %v1208, %v1205
        %v1212 = vld [vmem:[%s13] sm:$0x1]
        %v1214 = vlaneseq
        %v1215 = vshrl.u32 %v1214, 7
        %v1216 = vsub.s32 0, %v1215
        %v1217 = vrot.slane %v1212, %v1216
        %1219 = vmatprep.subr.bf16.mxu0 0
        %1220 = vmatpush1.bf16.msra.mxu0 0
        %1221 = vmatprep.subr.bf16.mxu0 0
        %1222 = vmatpush1.bf16.msra.mxu0 0
        %1223 = vmatprep.subr.bf16.mxu0 0
        %1224 = vmatpush1.bf16.msra.mxu0 0
        %1225 = vmatprep.subr.bf16.mxu0 0
        %1226 = vmatpush1.bf16.msra.mxu0 0
        %1227 = vmatprep.subr.bf16.mxu0 0
        %1228 = vmatpush1.bf16.msra.mxu0 0
        %1229 = vmatprep.subr.bf16.mxu0 0
        %1230 = vmatpush1.bf16.msra.mxu0 0
        %1231 = vmatprep.subr.bf16.mxu0 0
        %1232 = vmatpush1.bf16.msra.mxu0 0
        %1233 = vmatprep.subr.bf16.mxu0 0
        %1234 = vmatpush1.bf16.msra.mxu0 %v1211
        %1235 = vmatprep.subr.bf16.mxu0 0
        %1236 = vmatpush2.bf16.msra.mxu0 0
        %1237 = vmatprep.subr.bf16.mxu0 0
        %1238 = vmatpush2.bf16.msra.mxu0 0
        %1239 = vmatprep.subr.bf16.mxu0 0
        %1240 = vmatpush2.bf16.msra.mxu0 0
        %1241 = vmatprep.subr.bf16.mxu0 0
        %1242 = vmatpush2.bf16.msra.mxu0 0
        %1243 = vmatprep.subr.bf16.mxu0 0
        %1244 = vmatpush2.bf16.msra.mxu0 0
        %1245 = vmatprep.subr.bf16.mxu0 0
        %1246 = vmatpush2.bf16.msra.mxu0 0
        %1247 = vmatprep.subr.bf16.mxu0 0
        %1248 = vmatpush2.bf16.msra.mxu0 0
        %1249 = vmatprep.subr.bf16.mxu0 0
        %1250 = vmatpush2.bf16.msra.mxu0 0
        %1251 = vmatprep.mubr.bf16.mxu0 0
        %1252 = vmatmul.mubr.bf16.gmra.mxu0 %v869
        %v1253 = vpop.f32.mrf.mxu0
        %v1254 = vadd.f32 %v1217, %v1253
        %v1255 = vpop.f32.mrf.mxu0
        %v1256 = vpop.f32.mrf.mxu0
        %v1257 = vadd.f32 %v1217, %v1256
        %v1258 = vpop.f32.mrf.mxu0
        %1259 = vdwg.mxu0
        %v1260 = vmax.f32 %v1254, 0.0
        %v1261 = vmax.f32 %v1257, 0.0
        %v1262 = vld [vmem:[#allocation17] sm:$0xf]
        %v1263 = vld [vmem:[#allocation17 + $0x4] sm:$0xf]
        %v1264 = vld [vmem:[#allocation17 + $0x8] sm:$0xf]
        %v1265 = vld [vmem:[#allocation17 + $0xc] sm:$0xf]
        %v1266 = vpack.c.bf16 %v1261, %v1260
        %v1271 = vunpack.c.l.b16 %v1262
        %v1272 = vunpack.c.l.b16 %v1263
        %v1273 = vunpack.c.l.b16 %v1264
        %v1274 = vunpack.c.l.b16 %v1265
        %v1275 = vpack.c.b16 %v1272, %v1271
        %v1276 = vpack.c.b16 %v1274, %v1273
        %v1280 = vsel %vm691, %v1266, 0
        %1282 = vmatprep.subr.bf16.mxu0 0
        %1283 = vmatpush1.bf16.msra.mxu0 0
        %1284 = vmatprep.subr.bf16.mxu0 0
        %1285 = vmatpush1.bf16.msra.mxu0 0
        %1286 = vmatprep.subr.bf16.mxu0 0
        %1287 = vmatpush1.bf16.msra.mxu0 0
        %1288 = vmatprep.subr.bf16.mxu0 0
        %1289 = vmatpush1.bf16.msra.mxu0 0
        %1290 = vmatprep.subr.bf16.mxu0 0
        %1291 = vmatpush1.bf16.msra.mxu0 0
        %1292 = vmatprep.subr.bf16.mxu0 0
        %1293 = vmatpush1.bf16.msra.mxu0 0
        %1294 = vmatprep.subr.bf16.mxu0 0
        %1295 = vmatpush1.bf16.msra.mxu0 %v1276
        %1296 = vmatprep.subr.bf16.mxu0 0
        %1297 = vmatpush1.bf16.msra.mxu0 %v1275
        %1298 = vmatprep.subr.bf16.mxu0 0
        %1299 = vmatpush2.bf16.msra.mxu0 0
        %1300 = vmatprep.subr.bf16.mxu0 0
        %1301 = vmatpush2.bf16.msra.mxu0 0
        %1302 = vmatprep.subr.bf16.mxu0 0
        %1303 = vmatpush2.bf16.msra.mxu0 0
        %1304 = vmatprep.subr.bf16.mxu0 0
        %1305 = vmatpush2.bf16.msra.mxu0 0
        %1306 = vmatprep.subr.bf16.mxu0 0
        %1307 = vmatpush2.bf16.msra.mxu0 0
        %1308 = vmatprep.subr.bf16.mxu0 0
        %1309 = vmatpush2.bf16.msra.mxu0 0
        %1310 = vmatprep.subr.bf16.mxu0 0
        %1311 = vmatpush2.bf16.msra.mxu0 0
        %1312 = vmatprep.subr.bf16.mxu0 0
        %1313 = vmatpush2.bf16.msra.mxu0 0
        %1314 = vmatprep.mubr.bf16.mxu0 0
        %1315 = vmatmul.mubr.bf16.gmra.mxu0 %v1280
        %v1316 = vpop.f32.mrf.mxu0
        %v1317 = vadd.f32 0.0, %v1316
        %v1318 = vpop.f32.mrf.mxu0
        %v1319 = vpop.f32.mrf.mxu0
        %v1320 = vadd.f32 0.0, %v1319
        %v1321 = vpop.f32.mrf.mxu0
        %1322 = vdwg.mxu0
        %v1323 = vpack.c.bf16 %v1320, %v1317
        %v1324 = vld [vmem:[%s14] sm:$0x1]
        %v1326 = vlaneseq
        %v1327 = vshrl.u32 %v1326, 7
        %v1328 = vsub.s32 0, %v1327
        %v1329 = vrot.slane %v1324, %v1328
        %1331 = vmatprep.subr.bf16.mxu0 0
        %1332 = vmatpush1.bf16.msra.mxu0 0
        %1333 = vmatprep.subr.bf16.mxu0 0
        %1334 = vmatpush1.bf16.msra.mxu0 0
        %1335 = vmatprep.subr.bf16.mxu0 0
        %1336 = vmatpush1.bf16.msra.mxu0 0
        %1337 = vmatprep.subr.bf16.mxu0 0
        %1338 = vmatpush1.bf16.msra.mxu0 0
        %1339 = vmatprep.subr.bf16.mxu0 0
        %1340 = vmatpush1.bf16.msra.mxu0 0
        %1341 = vmatprep.subr.bf16.mxu0 0
        %1342 = vmatpush1.bf16.msra.mxu0 0
        %1343 = vmatprep.subr.bf16.mxu0 0
        %1344 = vmatpush1.bf16.msra.mxu0 0
        %1345 = vmatprep.subr.bf16.mxu0 0
        %1346 = vmatpush1.bf16.msra.mxu0 %v1323
        %1347 = vmatprep.subr.bf16.mxu0 0
        %1348 = vmatpush2.bf16.msra.mxu0 0
        %1349 = vmatprep.subr.bf16.mxu0 0
        %1350 = vmatpush2.bf16.msra.mxu0 0
        %1351 = vmatprep.subr.bf16.mxu0 0
        %1352 = vmatpush2.bf16.msra.mxu0 0
        %1353 = vmatprep.subr.bf16.mxu0 0
        %1354 = vmatpush2.bf16.msra.mxu0 0
        %1355 = vmatprep.subr.bf16.mxu0 0
        %1356 = vmatpush2.bf16.msra.mxu0 0
        %1357 = vmatprep.subr.bf16.mxu0 0
        %1358 = vmatpush2.bf16.msra.mxu0 0
        %1359 = vmatprep.subr.bf16.mxu0 0
        %1360 = vmatpush2.bf16.msra.mxu0 0
        %1361 = vmatprep.subr.bf16.mxu0 0
        %1362 = vmatpush2.bf16.msra.mxu0 0
        %1363 = vmatprep.mubr.bf16.mxu0 0
        %1364 = vmatmul.mubr.bf16.gmra.mxu0 %v869
        %v1365 = vpop.f32.mrf.mxu0
        %v1366 = vadd.f32 %v1329, %v1365
        %v1367 = vpop.f32.mrf.mxu0
        %v1368 = vpop.f32.mrf.mxu0
        %v1369 = vadd.f32 %v1329, %v1368
        %v1370 = vpop.f32.mrf.mxu0
        %1371 = vdwg.mxu0
        %v1372 = vmax.f32 %v1366, 0.0
        %v1373 = vmax.f32 %v1369, 0.0
        %v1374 = vld [vmem:[%s9] sm:$0xf]
        %v1375 = vld [vmem:[%s9 + $0x4] sm:$0xf]
        %v1376 = vld [vmem:[%s9 + $0x8] sm:$0xf]
        %v1377 = vld [vmem:[%s9 + $0xc] sm:$0xf]
        %v1378 = vpack.c.bf16 %v1373, %v1372
        %v1383 = vunpack.c.l.b16 %v1374
        %v1384 = vunpack.c.l.b16 %v1375
        %v1385 = vunpack.c.l.b16 %v1376
        %v1386 = vunpack.c.l.b16 %v1377
        %v1387 = vpack.c.b16 %v1384, %v1383
        %v1388 = vpack.c.b16 %v1386, %v1385
        %v1392 = vsel %vm691, %v1378, 0
        %1394 = vmatprep.subr.bf16.mxu0 0
        %1395 = vmatpush1.bf16.msra.mxu0 0
        %1396 = vmatprep.subr.bf16.mxu0 0
        %1397 = vmatpush1.bf16.msra.mxu0 0
        %1398 = vmatprep.subr.bf16.mxu0 0
        %1399 = vmatpush1.bf16.msra.mxu0 0
        %1400 = vmatprep.subr.bf16.mxu0 0
        %1401 = vmatpush1.bf16.msra.mxu0 0
        %1402 = vmatprep.subr.bf16.mxu0 0
        %1403 = vmatpush1.bf16.msra.mxu0 0
        %1404 = vmatprep.subr.bf16.mxu0 0
        %1405 = vmatpush1.bf16.msra.mxu0 0
        %1406 = vmatprep.subr.bf16.mxu0 0
        %1407 = vmatpush1.bf16.msra.mxu0 %v1388
        %1408 = vmatprep.subr.bf16.mxu0 0
        %1409 = vmatpush1.bf16.msra.mxu0 %v1387
        %1410 = vmatprep.subr.bf16.mxu0 0
        %1411 = vmatpush2.bf16.msra.mxu0 0
        %1412 = vmatprep.subr.bf16.mxu0 0
        %1413 = vmatpush2.bf16.msra.mxu0 0
        %1414 = vmatprep.subr.bf16.mxu0 0
        %1415 = vmatpush2.bf16.msra.mxu0 0
        %1416 = vmatprep.subr.bf16.mxu0 0
        %1417 = vmatpush2.bf16.msra.mxu0 0
        %1418 = vmatprep.subr.bf16.mxu0 0
        %1419 = vmatpush2.bf16.msra.mxu0 0
        %1420 = vmatprep.subr.bf16.mxu0 0
        %1421 = vmatpush2.bf16.msra.mxu0 0
        %1422 = vmatprep.subr.bf16.mxu0 0
        %1423 = vmatpush2.bf16.msra.mxu0 0
        %1424 = vmatprep.subr.bf16.mxu0 0
        %1425 = vmatpush2.bf16.msra.mxu0 0
        %1426 = vmatprep.mubr.bf16.mxu0 0
        %1427 = vmatmul.mubr.bf16.gmra.mxu0 %v1392
        %v1428 = vpop.f32.mrf.mxu0
        %v1429 = vadd.f32 0.0, %v1428
        %v1430 = vpop.f32.mrf.mxu0
        %v1431 = vpop.f32.mrf.mxu0
        %v1432 = vadd.f32 0.0, %v1431
        %v1433 = vpop.f32.mrf.mxu0
        %1434 = vdwg.mxu0
        %v1435 = vpack.c.bf16 %v1432, %v1429
        %v1436 = vld [vmem:[%s15] sm:$0x1]
        %v1438 = vlaneseq
        %v1439 = vshrl.u32 %v1438, 7
        %v1440 = vsub.s32 0, %v1439
        %v1441 = vrot.slane %v1436, %v1440
        %1443 = vmatprep.subr.bf16.mxu0 0
        %1444 = vmatpush1.bf16.msra.mxu0 0
        %1445 = vmatprep.subr.bf16.mxu0 0
        %1446 = vmatpush1.bf16.msra.mxu0 0
        %1447 = vmatprep.subr.bf16.mxu0 0
        %1448 = vmatpush1.bf16.msra.mxu0 0
        %1449 = vmatprep.subr.bf16.mxu0 0
        %1450 = vmatpush1.bf16.msra.mxu0 0
        %1451 = vmatprep.subr.bf16.mxu0 0
        %1452 = vmatpush1.bf16.msra.mxu0 0
        %1453 = vmatprep.subr.bf16.mxu0 0
        %1454 = vmatpush1.bf16.msra.mxu0 0
        %1455 = vmatprep.subr.bf16.mxu0 0
        %1456 = vmatpush1.bf16.msra.mxu0 0
        %1457 = vmatprep.subr.bf16.mxu0 0
        %1458 = vmatpush1.bf16.msra.mxu0 %v1435
        %1459 = vmatprep.subr.bf16.mxu0 0
        %1460 = vmatpush2.bf16.msra.mxu0 0
        %1461 = vmatprep.subr.bf16.mxu0 0
        %1462 = vmatpush2.bf16.msra.mxu0 0
        %1463 = vmatprep.subr.bf16.mxu0 0
        %1464 = vmatpush2.bf16.msra.mxu0 0
        %1465 = vmatprep.subr.bf16.mxu0 0
        %1466 = vmatpush2.bf16.msra.mxu0 0
        %1467 = vmatprep.subr.bf16.mxu0 0
        %1468 = vmatpush2.bf16.msra.mxu0 0
        %1469 = vmatprep.subr.bf16.mxu0 0
        %1470 = vmatpush2.bf16.msra.mxu0 0
        %1471 = vmatprep.subr.bf16.mxu0 0
        %1472 = vmatpush2.bf16.msra.mxu0 0
        %1473 = vmatprep.subr.bf16.mxu0 0
        %1474 = vmatpush2.bf16.msra.mxu0 0
        %1475 = vmatprep.mubr.bf16.mxu0 0
        %1476 = vmatmul.mubr.bf16.gmra.mxu0 %v869
        %v1477 = vpop.f32.mrf.mxu0
        %v1478 = vadd.f32 %v1441, %v1477
        %v1479 = vpop.f32.mrf.mxu0
        %v1480 = vpop.f32.mrf.mxu0
        %v1481 = vadd.f32 %v1441, %v1480
        %v1482 = vpop.f32.mrf.mxu0
        %1483 = vdwg.mxu0
        %v1484 = vtanh.pop %v1478
        %v1485 = vtanh.pop %v1481
        %1488 = vrot.lane.b32.xlu0 %v668, 32
        %v1489 = vpop.permute.xlu0 %1488
        %1490 = vrot.lane.b32.xlu0 %v669, 32
        %v1491 = vpop.permute.xlu0 %1490
        %v1494 = vmul.f32 %v1145, %v1489
        %v1495 = vmul.f32 %v1147, %v1491
        %v1496 = vsub.f32 1.0, %v1145
        %v1497 = vsub.f32 1.0, %v1147
        %1500 = vrot.lane.b32.xlu0 %v1484, 32
        %v1501 = vpop.permute.xlu0 %1500
        %1502 = vrot.lane.b32.xlu0 %v1485, 32
        %v1503 = vpop.permute.xlu0 %1502
        %v1506 = vmul.f32 %v1496, %v1501
        %v1507 = vmul.f32 %v1497, %v1503
        %v1508 = vadd.f32 %v1494, %v1506
        %v1509 = vadd.f32 %v1495, %v1507
        %1512 = vrot.lane.b32.xlu0 %v1508, 96
        %v1513 = vpop.permute.xlu0 %1512
        %1514 = vrot.lane.b32.xlu0 %v1509, 96
        %v1515 = vpop.permute.xlu0 %1514
        %1518 = vst.msk [vmem:[#allocation2] sm:$0xff] %vm691, %v1513
        %1519 = vst.msk [vmem:[#allocation2 + $0x8] sm:$0xff] %vm691, %v1515
        %1520 = vst.msk [vmem:[%s655] sm:$0xff] %vm691, %v1513
        %1521 = vst.msk [vmem:[%s655 + $0x8] sm:$0xff] %vm691, %v1515
        %s1522 = sand.u32 %s386, 1
        %s1523 = scalar_lea.sflag [#allocation5], %s1522
        %s1524 = sand.u32 %s386, 1
        %s1525 = smul.addr %s1524, 16
        %s1526 = scalar_lea.vmem [#allocation18], %s1525
        // Predicated region
        $region125: #{tpu_custom_call.1} parent=83 // pred_check
          %p1527 = pneg %p396
        $region126: #{tpu_custom_call.1} parent=83 // pred_check_branch
          %1529 = sbr.rel (%p1527) target = $region128
        $region127: #{tpu_custom_call.1} parent=83 // pred_region
          %s1531 = ssub.s32 256, 256
          %1532 = vsyncadd %s1523, %s1531
          %s1533 = smul.addr %s37, 2
          %s1534 = smul.addr %s1533, 128
          %s1535 = scalar_lea.hbm %s16, %s1534
          %s1536 = sshll.u32 %s1526, 4
          %s1537 = int_to_ptr.vmem [resolvable:$true] %s1536
          %1542 = dma.vmem_to_hbm [thread:$0]  %s1537, 256, %s1535, %s1523, 128, 128, 8
        $region128: #{tpu_custom_call.1} parent=83 // pred_fallthru
          _
      $region84: #{tpu_custom_call.1} parent=5 // pred_fallthru
        _
      %p1543 = scmp.le.s32.totalorder 2, %s32
      // Predicated region
      $region129: #{tpu_custom_call.1} parent=5 // pred_check
        %p1544 = pneg %p1543
      $region130: #{tpu_custom_call.1} parent=5 // pred_check_branch
        %1546 = sbr.rel (%p1544) target = $region132
      $region131: #{tpu_custom_call.1} parent=5 // pred_region
        %s1547 = ssub.s32 %s32, 2
        // Predicated region
        $region133: #{tpu_custom_call.1} parent=131 // pred_check
          %p1548 = pneg %p402
        $region134: #{tpu_custom_call.1} parent=131 // pred_check_branch
          %1550 = sbr.rel (%p1548) target = $region136
        $region135: #{tpu_custom_call.1} parent=131 // pred_region
          %s1551 = sand.u32 %s387, 1
          %s1552 = scalar_lea.sflag [#allocation5], %s1551
          %s1553 = sand.u32 %s387, 1
          %s1554 = smul.addr %s1553, 16
          %s1555 = scalar_lea.vmem [#allocation18], %s1554
          %1556 = dma.done %s1552, 256
        $region136: #{tpu_custom_call.1} parent=131 // pred_fallthru
          _
      $region132: #{tpu_custom_call.1} parent=5 // pred_fallthru
        _
    $region6: #{tpu_custom_call.1} parent=1 // loop_footer
      %s36 = sadd.s32 1, %s32
    $region7: #{tpu_custom_call.1} parent=1 // loop_footer_branch
      %31 = sbr.rel target = $region3
    $region8: #{tpu_custom_call.1} parent=1 // loop_exit
      _
    %1557 = vsyncpa [#allocation4], 1
    %s1558 = scalar_lea.sflag [#allocation4], 1
    %1559 = vsyncpa %s1558, 1
    %1560 = vsyncpa [#allocation7], 1
    %s1561 = scalar_lea.sflag [#allocation7], 1
    %1562 = vsyncpa %s1561, 1
    %1563 = vsyncpa [#allocation10], 1
    %1564 = vsyncpa [#allocation13], 1
    %1565 = vsyncpa [#allocation16], 1
    %1566 = vsyncpa [#allocation5], 1
    %s1567 = scalar_lea.sflag [#allocation5], 1
    %1568 = vsyncpa %s1567, 1

</llo_original>
